<compile_context>
chip_gen: v7x
topology: tpu7x:2x2x1
jax: 0.10.0
libtpu: 0.0.40
codegen_flags: <defaults>
</compile_context>

<pallas_src>
import jax
import jax.numpy as jnp
from jax.experimental import pallas as pl
from jax.experimental.pallas import tpu as pltpu


def _cdiv(a, b):
    return -(-a // b)


def _round_up(n, m):
    return _cdiv(n, m) * m


def _mlp_kernel(x_ref,
                w1_ref, b1_ref,
                w2_ref, b2_ref,
                w3_ref, b3_ref,
                w4_ref, b4_ref,
                w5_ref, b5_ref,
                wo_ref, bo_ref,
                out_ref):
    """Six-layer MLP in batch-folded (block-diagonal) layout.

    x_ref  : [G*4, L]   grouped inputs (group g's 4 features in rows 4g..4g+3)
    w1_ref : [G*H, G*4] block-diagonal layer-1 weight (tanh-reparameterized)
    wk_ref : [G*H, G*H] block-diagonal hidden weights, k = 2..5
    bk_ref : [G*H, 1]   per-group-replicated biases
    wo_ref : [H, 1]     output weight column (shared by all groups)
    bo_ref : [G, 1]     output bias (replicated per group)
    out_ref: [G, L]
    """
    f32 = jnp.float32

    # Layer 1: [G*H, G*4] @ [G*4, L] — full output rows on the MXU.
    t = jnp.tanh(jnp.dot(w1_ref[...], x_ref[...], preferred_element_type=f32)
                 + b1_ref[...])

    # Hidden layers 2..5: block-diagonal [G*H, G*H] @ [G*H, L] MXU matmuls.
    for w_ref, b_ref in ((w2_ref, b2_ref), (w3_ref, b3_ref),
                         (w4_ref, b4_ref), (w5_ref, b5_ref)):
        t = jnp.tanh(jnp.dot(w_ref[...], t, preferred_element_type=f32)
                     + b_ref[...])

    # Output layer: per-group VPU multiply + sublane reduce (no MXU).
    H = wo_ref.shape[0]
    G = bo_ref.shape[0]
    wo = wo_ref[...]                                           # [H, 1]
    rows = []
    for g in range(G):                                         # static unroll, G small
        seg = t[g * H:(g + 1) * H, :] * wo                     # [H, L]  VPU
        rows.append(jnp.sum(seg, axis=0, keepdims=True))       # [1, L]  sublane reduce
    out = jnp.concatenate(rows, axis=0) + bo_ref[...]          # [G, L]
    out_ref[...] = out.astype(out_ref.dtype)


def net_forward(U, I, V, t, params, *, group=8, max_lane_tile=2048):
    """Pallas implementation of Net.forward.

    U, I, V, t : [B, 1] float32 arrays.
    params     : dict with W1..W5, Wo in torch layout ([out, in]) and b1..b5,
                 bo as column vectors ([out, 1]).
    group      : batch-fold factor G; pick so G*H hits the MXU native width
                 (8 -> 256 on v6e/v7x, 4 -> 128 on v5e).
    Returns    : [B, 1] float32 output.
    """
    # TODO(synk): pallas_call has no autodiff rule; PINN training (grads w.r.t.
    # U/I/V/t and params, as in Net.predict) needs a custom_vjp or pure-JAX path.
    f32 = jnp.float32
    B = U.shape[0]
    H = params["W1"].shape[0]
    G = group

    # ---- host-side parameter prep (tiny tensors, cached under jit) ----------
    # Exact sigmoid -> tanh reparameterization.  With a_k = 0.5*t_k + 0.5:
    #   t_1 = tanh(0.5*W1 x + 0.5*b1)
    #   t_k = tanh(0.25*Wk t_{k-1} + 0.25*Wk@1 + 0.5*bk)         k = 2..5
    #   out = 0.5*Wo t_5 + (0.5*Wo@1 + bo)
    W1 = params["W1"].astype(f32)
    b1 = params["b1"].astype(f32)
    W1p, b1p = 0.5 * W1, 0.5 * b1
    hidden = []
    for n in ("2", "3", "4", "5"):
        W = params[f"W{n}"].astype(f32)
        b = params[f"b{n}"].astype(f32)
        hidden.append((0.25 * W,
                       0.25 * jnp.sum(W, axis=1, keepdims=True) + 0.5 * b))
    Wo = params["Wo"].astype(f32)
    bo = params["bo"].astype(f32)
    Wop = 0.5 * Wo                                              # [1, H]
    bop = 0.5 * jnp.sum(Wo, axis=1, keepdims=True) + bo         # [1, 1]

    # Block-diagonal batch fold: replicate each weight G times on the diagonal.
    eye = jnp.eye(G, dtype=f32)
    blk = lambda W: jnp.kron(eye, W)
    rep = lambda b: jnp.tile(b, (G, 1))
    w1f, b1f = blk(W1p), rep(b1p)                               # [G*H, G*4], [G*H, 1]
    hidf = [(blk(W), rep(b)) for W, b in hidden]                # [G*H, G*H], [G*H, 1]
    wo_col = Wop.reshape(H, 1)                                  # [H, 1]
    bo_rep = rep(bop)                                           # [G, 1]

    # ---- batch layout: [4, B] -> grouped [G*4, L] ----------------------------
    # Batch element b = g*L + j lives in sublane group g, lane j.
    lanes_needed = max(_cdiv(B, G), 1)
    # Lane tile: multiple of 128, big enough to amortize ~0.35 us/step, small
    # enough that the grid gets >= 2 steps when the batch allows it (v7x has
    # 2 TensorCores; "parallel" only shards if grid >= 2).  VMEM is not the
    # limit here — per-tile footprint is a few MiB on all generations.
    tbl = max(128, min(max_lane_tile, _round_up(_cdiv(lanes_needed, 2), 128)))
    n_steps = _cdiv(lanes_needed, tbl)
    L = n_steps * tbl
    Bp = G * L

    x4 = jnp.concatenate(
        [U.reshape(1, B), I.reshape(1, B), V.reshape(1, B), t.reshape(1, B)],
        axis=0).astype(f32)                                     # [4, B]
    if Bp != B:
        # Zero padding flows bounded tanh values through the net; sliced off below.
        x4 = jnp.pad(x4, ((0, 0), (0, Bp - B)))
    x = x4.reshape(4, G, L).transpose(1, 0, 2).reshape(G * 4, L)  # [G*4, L]

    const = lambda i: (0, 0)   # constant index maps -> weights stay resident in VMEM
    in_specs = [pl.BlockSpec((G * 4, tbl), lambda i: (0, i))]     # x tile
    args = [x]
    in_specs += [pl.BlockSpec((G * H, G * 4), const),
                 pl.BlockSpec((G * H, 1), const)]
    args += [w1f, b1f]
    for W, b in hidf:
        in_specs += [pl.BlockSpec((G * H, G * H), const),
                     pl.BlockSpec((G * H, 1), const)]
        args += [W, b]
    in_specs += [pl.BlockSpec((H, 1), const), pl.BlockSpec((G, 1), const)]
    args += [wo_col, bo_rep]

    out = pl.pallas_call(
        _mlp_kernel,
        out_shape=jax.ShapeDtypeStruct((G, L), f32),
        grid=(n_steps,),
        in_specs=in_specs,
        out_specs=pl.BlockSpec((G, tbl), lambda i: (0, i)),
        compiler_params=pltpu.CompilerParams(
            dimension_semantics=("parallel",)),
    )(*args)

    # Row-major flatten of [G, L] gives batch order g*L + j; drop padding.
    return out.reshape(Bp)[:B].reshape(B, 1)


def init_params(size, key):
    """Deterministic init matching torch nn.Linear layout: W [out, in], b [out, 1]."""
    dims = [(size, 4), (size, size), (size, size),
            (size, size), (size, size), (1, size)]
    names = ["1", "2", "3", "4", "5", "o"]
    params = {}
    for (fan_out, fan_in), name in zip(dims, names):
        key, kw, kb = jax.random.split(key, 3)
        bound = 1.0 / (fan_in ** 0.5)  # torch default uniform(-1/sqrt(fan_in), ...)
        params[f"W{name}"] = jax.random.uniform(
            kw, (fan_out, fan_in), jnp.float32, -bound, bound)
        params[f"b{name}"] = jax.random.uniform(
            kb, (fan_out, 1), jnp.float32, -bound, bound)
    return params


if __name__ == "__main__":
    size = 32     # hidden width of the PINN
    B = 200       # batch of collocation points (spans two sublane groups)

    key = jax.random.PRNGKey(0)
    kp, kU, kI, kV, kt = jax.random.split(key, 5)

    params = init_params(size, kp)
    U = jax.random.normal(kU, (B, 1), jnp.float32)
    I = jax.random.normal(kI, (B, 1), jnp.float32)
    V = jax.random.normal(kV, (B, 1), jnp.float32)
    t = jax.random.uniform(kt, (B, 1), jnp.float32)

    out = net_forward(U, I, V, t, params)
    out = jax.block_until_ready(out)

    # Pure-JAX f32 reference of the original (sigmoid) forward pass, torch layout.
    hp = jax.lax.Precision.HIGHEST
    def ref_forward(U, I, V, t, p):
        h = jnp.concatenate([U, I, V, t], axis=1)                  # [B, 4]
        for n in ("1", "2", "3", "4", "5"):
            z = jnp.einsum("bi,oi->bo", h, p[f"W{n}"], precision=hp) + p[f"b{n}"].T
            h = jax.nn.sigmoid(z)
        return jnp.einsum("bi,oi->bo", h, p["Wo"], precision=hp) + p["bo"].T

    ref = ref_forward(U, I, V, t, params)
    assert out.shape == (B, 1)
    err = float(jnp.max(jnp.abs(out - ref)))
    # All-f32 path: agreement is typically ~1e-5; loose bound only guards
    # against reduced-precision MXU accumulation modes.
    assert jnp.allclose(out, ref, atol=2e-2, rtol=2e-2), f"max abs err {err}"

    print("KERNEL_OK")
</pallas_src>

<mosaic_0001>
module attributes {stable_mosaic.version = 11 : i64} {
  func.func @_mlp_kernel(%arg0: i32, %arg1: memref<32x128xf32, #tpu.memory_space<vmem>>, %arg2: memref<256x32xf32, #tpu.memory_space<vmem>>, %arg3: memref<256x1xf32, #tpu.memory_space<vmem>>, %arg4: memref<256x256xf32, #tpu.memory_space<vmem>>, %arg5: memref<256x1xf32, #tpu.memory_space<vmem>>, %arg6: memref<256x256xf32, #tpu.memory_space<vmem>>, %arg7: memref<256x1xf32, #tpu.memory_space<vmem>>, %arg8: memref<256x256xf32, #tpu.memory_space<vmem>>, %arg9: memref<256x1xf32, #tpu.memory_space<vmem>>, %arg10: memref<256x256xf32, #tpu.memory_space<vmem>>, %arg11: memref<256x1xf32, #tpu.memory_space<vmem>>, %arg12: memref<32x1xf32, #tpu.memory_space<vmem>>, %arg13: memref<8x1xf32, #tpu.memory_space<vmem>>, %arg14: memref<8x128xf32, #tpu.memory_space<vmem>>) attributes {dimension_semantics = [#tpu.dimension_semantics<parallel>], iteration_bounds = array<i64: 1>, scalar_prefetch = 0 : i64, scratch_operands = 0 : i64, tpu.core_type = #tpu.core_type<tc>, window_params = [{transform_indices = @transform_0, window_bounds = array<i64: 32, 128>}, {pipeline_mode = #tpu.pipeline_mode<synchronous>, transform_indices = @transform_1, window_bounds = array<i64: 256, 32>}, {pipeline_mode = #tpu.pipeline_mode<synchronous>, transform_indices = @transform_2, window_bounds = array<i64: 256, 1>}, {pipeline_mode = #tpu.pipeline_mode<synchronous>, transform_indices = @transform_3, window_bounds = array<i64: 256, 256>}, {pipeline_mode = #tpu.pipeline_mode<synchronous>, transform_indices = @transform_4, window_bounds = array<i64: 256, 1>}, {pipeline_mode = #tpu.pipeline_mode<synchronous>, transform_indices = @transform_5, window_bounds = array<i64: 256, 256>}, {pipeline_mode = #tpu.pipeline_mode<synchronous>, transform_indices = @transform_6, window_bounds = array<i64: 256, 1>}, {pipeline_mode = #tpu.pipeline_mode<synchronous>, transform_indices = @transform_7, window_bounds = array<i64: 256, 256>}, {pipeline_mode = #tpu.pipeline_mode<synchronous>, transform_indices = @transform_8, window_bounds = array<i64: 256, 1>}, {pipeline_mode = #tpu.pipeline_mode<synchronous>, transform_indices = @transform_9, window_bounds = array<i64: 256, 256>}, {pipeline_mode = #tpu.pipeline_mode<synchronous>, transform_indices = @transform_10, window_bounds = array<i64: 256, 1>}, {pipeline_mode = #tpu.pipeline_mode<synchronous>, transform_indices = @transform_11, window_bounds = array<i64: 32, 1>}, {pipeline_mode = #tpu.pipeline_mode<synchronous>, transform_indices = @transform_12, window_bounds = array<i64: 8, 1>}, {transform_indices = @transform_13, window_bounds = array<i64: 8, 128>}]} {
    %c0 = arith.constant 0 : index
    %c0_0 = arith.constant 0 : index
    %0 = vector.load %arg2[%c0, %c0_0] : memref<256x32xf32, #tpu.memory_space<vmem>>, vector<256x32xf32>
    %c0_1 = arith.constant 0 : index
    %c0_2 = arith.constant 0 : index
    %1 = vector.load %arg1[%c0_1, %c0_2] : memref<32x128xf32, #tpu.memory_space<vmem>>, vector<32x128xf32>
    %cst = arith.constant dense<0.000000e+00> : vector<256x128xf32>
    %2 = tpu.matmul %0, %1, %cst {dimension_numbers = #tpu.dot_dimension_numbers<[1], [0], [0], [1], [0, 0, 1, 1], [], []>} : vector<256x32xf32>, vector<32x128xf32>, vector<256x128xf32> -> vector<256x128xf32>
    %c0_3 = arith.constant 0 : index
    %c0_4 = arith.constant 0 : index
    %3 = vector.load %arg3[%c0_3, %c0_4] : memref<256x1xf32, #tpu.memory_space<vmem>>, vector<256x1xf32>
    %4 = vector.broadcast %3 : vector<256x1xf32> to vector<256x128xf32>
    %5 = arith.addf %2, %4 : vector<256x128xf32>
    %6 = math.tanh %5 : vector<256x128xf32>
    %c0_5 = arith.constant 0 : index
    %c0_6 = arith.constant 0 : index
    %7 = vector.load %arg4[%c0_5, %c0_6] : memref<256x256xf32, #tpu.memory_space<vmem>>, vector<256x256xf32>
    %cst_7 = arith.constant dense<0.000000e+00> : vector<256x128xf32>
    %8 = tpu.matmul %7, %6, %cst_7 {dimension_numbers = #tpu.dot_dimension_numbers<[1], [0], [0], [1], [0, 0, 1, 1], [], []>} : vector<256x256xf32>, vector<256x128xf32>, vector<256x128xf32> -> vector<256x128xf32>
    %c0_8 = arith.constant 0 : index
    %c0_9 = arith.constant 0 : index
    %9 = vector.load %arg5[%c0_8, %c0_9] : memref<256x1xf32, #tpu.memory_space<vmem>>, vector<256x1xf32>
    %10 = vector.broadcast %9 : vector<256x1xf32> to vector<256x128xf32>
    %11 = arith.addf %8, %10 : vector<256x128xf32>
    %12 = math.tanh %11 : vector<256x128xf32>
    %c0_10 = arith.constant 0 : index
    %c0_11 = arith.constant 0 : index
    %13 = vector.load %arg6[%c0_10, %c0_11] : memref<256x256xf32, #tpu.memory_space<vmem>>, vector<256x256xf32>
    %cst_12 = arith.constant dense<0.000000e+00> : vector<256x128xf32>
    %14 = tpu.matmul %13, %12, %cst_12 {dimension_numbers = #tpu.dot_dimension_numbers<[1], [0], [0], [1], [0, 0, 1, 1], [], []>} : vector<256x256xf32>, vector<256x128xf32>, vector<256x128xf32> -> vector<256x128xf32>
    %c0_13 = arith.constant 0 : index
    %c0_14 = arith.constant 0 : index
    %15 = vector.load %arg7[%c0_13, %c0_14] : memref<256x1xf32, #tpu.memory_space<vmem>>, vector<256x1xf32>
    %16 = vector.broadcast %15 : vector<256x1xf32> to vector<256x128xf32>
    %17 = arith.addf %14, %16 : vector<256x128xf32>
    %18 = math.tanh %17 : vector<256x128xf32>
    %c0_15 = arith.constant 0 : index
    %c0_16 = arith.constant 0 : index
    %19 = vector.load %arg8[%c0_15, %c0_16] : memref<256x256xf32, #tpu.memory_space<vmem>>, vector<256x256xf32>
    %cst_17 = arith.constant dense<0.000000e+00> : vector<256x128xf32>
    %20 = tpu.matmul %19, %18, %cst_17 {dimension_numbers = #tpu.dot_dimension_numbers<[1], [0], [0], [1], [0, 0, 1, 1], [], []>} : vector<256x256xf32>, vector<256x128xf32>, vector<256x128xf32> -> vector<256x128xf32>
    %c0_18 = arith.constant 0 : index
    %c0_19 = arith.constant 0 : index
    %21 = vector.load %arg9[%c0_18, %c0_19] : memref<256x1xf32, #tpu.memory_space<vmem>>, vector<256x1xf32>
    %22 = vector.broadcast %21 : vector<256x1xf32> to vector<256x128xf32>
    %23 = arith.addf %20, %22 : vector<256x128xf32>
    %24 = math.tanh %23 : vector<256x128xf32>
    %c0_20 = arith.constant 0 : index
    %c0_21 = arith.constant 0 : index
    %25 = vector.load %arg10[%c0_20, %c0_21] : memref<256x256xf32, #tpu.memory_space<vmem>>, vector<256x256xf32>
    %cst_22 = arith.constant dense<0.000000e+00> : vector<256x128xf32>
    %26 = tpu.matmul %25, %24, %cst_22 {dimension_numbers = #tpu.dot_dimension_numbers<[1], [0], [0], [1], [0, 0, 1, 1], [], []>} : vector<256x256xf32>, vector<256x128xf32>, vector<256x128xf32> -> vector<256x128xf32>
    %c0_23 = arith.constant 0 : index
    %c0_24 = arith.constant 0 : index
    %27 = vector.load %arg11[%c0_23, %c0_24] : memref<256x1xf32, #tpu.memory_space<vmem>>, vector<256x1xf32>
    %28 = vector.broadcast %27 : vector<256x1xf32> to vector<256x128xf32>
    %29 = arith.addf %26, %28 : vector<256x128xf32>
    %30 = math.tanh %29 : vector<256x128xf32>
    %c0_25 = arith.constant 0 : index
    %c0_26 = arith.constant 0 : index
    %31 = vector.load %arg12[%c0_25, %c0_26] : memref<32x1xf32, #tpu.memory_space<vmem>>, vector<32x1xf32>
    %32 = vector.extract_strided_slice %30 {offsets = [0, 0], sizes = [32, 128], strides = [1, 1]} : vector<256x128xf32> to vector<32x128xf32>
    %33 = vector.broadcast %31 : vector<32x1xf32> to vector<32x128xf32>
    %34 = arith.mulf %32, %33 : vector<32x128xf32>
    %cst_27 = arith.constant dense<0.000000e+00> : vector<128xf32>
    %35 = vector.multi_reduction <add>, %34, %cst_27 [0] : vector<32x128xf32> to vector<128xf32>
    %36 = vector.shape_cast %35 : vector<128xf32> to vector<1x128xf32>
    %37 = vector.extract_strided_slice %30 {offsets = [32, 0], sizes = [32, 128], strides = [1, 1]} : vector<256x128xf32> to vector<32x128xf32>
    %38 = vector.broadcast %31 : vector<32x1xf32> to vector<32x128xf32>
    %39 = arith.mulf %37, %38 : vector<32x128xf32>
    %cst_28 = arith.constant dense<0.000000e+00> : vector<128xf32>
    %40 = vector.multi_reduction <add>, %39, %cst_28 [0] : vector<32x128xf32> to vector<128xf32>
    %41 = vector.shape_cast %40 : vector<128xf32> to vector<1x128xf32>
    %42 = vector.extract_strided_slice %30 {offsets = [64, 0], sizes = [32, 128], strides = [1, 1]} : vector<256x128xf32> to vector<32x128xf32>
    %43 = vector.broadcast %31 : vector<32x1xf32> to vector<32x128xf32>
    %44 = arith.mulf %42, %43 : vector<32x128xf32>
    %cst_29 = arith.constant dense<0.000000e+00> : vector<128xf32>
    %45 = vector.multi_reduction <add>, %44, %cst_29 [0] : vector<32x128xf32> to vector<128xf32>
    %46 = vector.shape_cast %45 : vector<128xf32> to vector<1x128xf32>
    %47 = vector.extract_strided_slice %30 {offsets = [96, 0], sizes = [32, 128], strides = [1, 1]} : vector<256x128xf32> to vector<32x128xf32>
    %48 = vector.broadcast %31 : vector<32x1xf32> to vector<32x128xf32>
    %49 = arith.mulf %47, %48 : vector<32x128xf32>
    %cst_30 = arith.constant dense<0.000000e+00> : vector<128xf32>
    %50 = vector.multi_reduction <add>, %49, %cst_30 [0] : vector<32x128xf32> to vector<128xf32>
    %51 = vector.shape_cast %50 : vector<128xf32> to vector<1x128xf32>
    %52 = vector.extract_strided_slice %30 {offsets = [128, 0], sizes = [32, 128], strides = [1, 1]} : vector<256x128xf32> to vector<32x128xf32>
    %53 = vector.broadcast %31 : vector<32x1xf32> to vector<32x128xf32>
    %54 = arith.mulf %52, %53 : vector<32x128xf32>
    %cst_31 = arith.constant dense<0.000000e+00> : vector<128xf32>
    %55 = vector.multi_reduction <add>, %54, %cst_31 [0] : vector<32x128xf32> to vector<128xf32>
    %56 = vector.shape_cast %55 : vector<128xf32> to vector<1x128xf32>
    %57 = vector.extract_strided_slice %30 {offsets = [160, 0], sizes = [32, 128], strides = [1, 1]} : vector<256x128xf32> to vector<32x128xf32>
    %58 = vector.broadcast %31 : vector<32x1xf32> to vector<32x128xf32>
    %59 = arith.mulf %57, %58 : vector<32x128xf32>
    %cst_32 = arith.constant dense<0.000000e+00> : vector<128xf32>
    %60 = vector.multi_reduction <add>, %59, %cst_32 [0] : vector<32x128xf32> to vector<128xf32>
    %61 = vector.shape_cast %60 : vector<128xf32> to vector<1x128xf32>
    %62 = vector.extract_strided_slice %30 {offsets = [192, 0], sizes = [32, 128], strides = [1, 1]} : vector<256x128xf32> to vector<32x128xf32>
    %63 = vector.broadcast %31 : vector<32x1xf32> to vector<32x128xf32>
    %64 = arith.mulf %62, %63 : vector<32x128xf32>
    %cst_33 = arith.constant dense<0.000000e+00> : vector<128xf32>
    %65 = vector.multi_reduction <add>, %64, %cst_33 [0] : vector<32x128xf32> to vector<128xf32>
    %66 = vector.shape_cast %65 : vector<128xf32> to vector<1x128xf32>
    %67 = vector.extract_strided_slice %30 {offsets = [224, 0], sizes = [32, 128], strides = [1, 1]} : vector<256x128xf32> to vector<32x128xf32>
    %68 = vector.broadcast %31 : vector<32x1xf32> to vector<32x128xf32>
    %69 = arith.mulf %67, %68 : vector<32x128xf32>
    %cst_34 = arith.constant dense<0.000000e+00> : vector<128xf32>
    %70 = vector.multi_reduction <add>, %69, %cst_34 [0] : vector<32x128xf32> to vector<128xf32>
    %71 = vector.shape_cast %70 : vector<128xf32> to vector<1x128xf32>
    %72 = tpu.concatenate %36, %41, %46, %51, %56, %61, %66, %71 in 0 : vector<1x128xf32>, vector<1x128xf32>, vector<1x128xf32>, vector<1x128xf32>, vector<1x128xf32>, vector<1x128xf32>, vector<1x128xf32>, vector<1x128xf32> -> vector<8x128xf32>
    %c0_35 = arith.constant 0 : index
    %c0_36 = arith.constant 0 : index
    %73 = vector.load %arg13[%c0_35, %c0_36] : memref<8x1xf32, #tpu.memory_space<vmem>>, vector<8x1xf32>
    %74 = vector.broadcast %73 : vector<8x1xf32> to vector<8x128xf32>
    %75 = arith.addf %72, %74 : vector<8x128xf32>
    %c0_37 = arith.constant 0 : index
    %c0_38 = arith.constant 0 : index
    %76 = vector.load %arg14[%c0_37, %c0_38] : memref<8x128xf32, #tpu.memory_space<vmem>>, vector<8x128xf32>
    tpu.vector_store %arg14[%c0_37, %c0_38], %75 {strides = array<i32>} : memref<8x128xf32, #tpu.memory_space<vmem>>, vector<8x128xf32>,
    return
  }
  func.func @transform_0(%arg0: i32) -> (i32, i32) {
    %c0_i32 = arith.constant 0 : i32
    %c0_i32_0 = arith.constant 0 : i32
    return %c0_i32, %arg0 : i32, i32
  }
  func.func @transform_1(%arg0: i32) -> (i32, i32) {
    %c0_i32 = arith.constant 0 : i32
    %c0_i32_0 = arith.constant 0 : i32
    %c0_i32_1 = arith.constant 0 : i32
    return %c0_i32, %c0_i32_0 : i32, i32
  }
  func.func @transform_2(%arg0: i32) -> (i32, i32) {
    %c0_i32 = arith.constant 0 : i32
    %c0_i32_0 = arith.constant 0 : i32
    %c0_i32_1 = arith.constant 0 : i32
    return %c0_i32, %c0_i32_0 : i32, i32
  }
  func.func @transform_3(%arg0: i32) -> (i32, i32) {
    %c0_i32 = arith.constant 0 : i32
    %c0_i32_0 = arith.constant 0 : i32
    %c0_i32_1 = arith.constant 0 : i32
    return %c0_i32, %c0_i32_0 : i32, i32
  }
  func.func @transform_4(%arg0: i32) -> (i32, i32) {
    %c0_i32 = arith.constant 0 : i32
    %c0_i32_0 = arith.constant 0 : i32
    %c0_i32_1 = arith.constant 0 : i32
    return %c0_i32, %c0_i32_0 : i32, i32
  }
  func.func @transform_5(%arg0: i32) -> (i32, i32) {
    %c0_i32 = arith.constant 0 : i32
    %c0_i32_0 = arith.constant 0 : i32
    %c0_i32_1 = arith.constant 0 : i32
    return %c0_i32, %c0_i32_0 : i32, i32
  }
  func.func @transform_6(%arg0: i32) -> (i32, i32) {
    %c0_i32 = arith.constant 0 : i32
    %c0_i32_0 = arith.constant 0 : i32
    %c0_i32_1 = arith.constant 0 : i32
    return %c0_i32, %c0_i32_0 : i32, i32
  }
  func.func @transform_7(%arg0: i32) -> (i32, i32) {
    %c0_i32 = arith.constant 0 : i32
    %c0_i32_0 = arith.constant 0 : i32
    %c0_i32_1 = arith.constant 0 : i32
    return %c0_i32, %c0_i32_0 : i32, i32
  }
  func.func @transform_8(%arg0: i32) -> (i32, i32) {
    %c0_i32 = arith.constant 0 : i32
    %c0_i32_0 = arith.constant 0 : i32
    %c0_i32_1 = arith.constant 0 : i32
    return %c0_i32, %c0_i32_0 : i32, i32
  }
  func.func @transform_9(%arg0: i32) -> (i32, i32) {
    %c0_i32 = arith.constant 0 : i32
    %c0_i32_0 = arith.constant 0 : i32
    %c0_i32_1 = arith.constant 0 : i32
    return %c0_i32, %c0_i32_0 : i32, i32
  }
  func.func @transform_10(%arg0: i32) -> (i32, i32) {
    %c0_i32 = arith.constant 0 : i32
    %c0_i32_0 = arith.constant 0 : i32
    %c0_i32_1 = arith.constant 0 : i32
    return %c0_i32, %c0_i32_0 : i32, i32
  }
  func.func @transform_11(%arg0: i32) -> (i32, i32) {
    %c0_i32 = arith.constant 0 : i32
    %c0_i32_0 = arith.constant 0 : i32
    %c0_i32_1 = arith.constant 0 : i32
    return %c0_i32, %c0_i32_0 : i32, i32
  }
  func.func @transform_12(%arg0: i32) -> (i32, i32) {
    %c0_i32 = arith.constant 0 : i32
    %c0_i32_0 = arith.constant 0 : i32
    %c0_i32_1 = arith.constant 0 : i32
    return %c0_i32, %c0_i32_0 : i32, i32
  }
  func.func @transform_13(%arg0: i32) -> (i32, i32) {
    %c0_i32 = arith.constant 0 : i32
    %c0_i32_0 = arith.constant 0 : i32
    return %c0_i32, %arg0 : i32, i32
  }
}

</mosaic_0001>

<llo_original>
// kernel: tpu_custom_call.1
$region0: #{tpu_custom_call.1}
  #allocation0 [shape = 'u32[]', space=smem, size = 0x4, offset = 0x4, fixed_abs, tag = 'smem constant byte address 0x4 - core index']
  #allocation1 [shape = 'u32[144,128]{1,0:T(1,128)}', space=vmem, size = 0x12000, scoped, tag = 'internal scratch']
  %s0 = inlined_call_operand.vmem [shape: f32[32,128], index: 0, kind: input, shape index: {}]
  %s1 = inlined_call_operand.vmem [shape: f32[256,32], index: 1, kind: input, shape index: {}]
  %s2 = inlined_call_operand.vmem [shape: f32[256,1], index: 2, kind: input, shape index: {}]
  %s3 = inlined_call_operand.vmem [shape: f32[256,256], index: 3, kind: input, shape index: {}]
  %s4 = inlined_call_operand.vmem [shape: f32[256,1], index: 4, kind: input, shape index: {}]
  %s5 = inlined_call_operand.vmem [shape: f32[256,256], index: 5, kind: input, shape index: {}]
  %s6 = inlined_call_operand.vmem [shape: f32[256,1], index: 6, kind: input, shape index: {}]
  %s7 = inlined_call_operand.vmem [shape: f32[256,256], index: 7, kind: input, shape index: {}]
  %s8 = inlined_call_operand.vmem [shape: f32[256,1], index: 8, kind: input, shape index: {}]
  %s9 = inlined_call_operand.hbm [shape: f32[256,256], index: 9, kind: input, shape index: {}]
  %s10 = inlined_call_operand.vmem [shape: f32[256,1], index: 10, kind: input, shape index: {}]
  %s11 = inlined_call_operand.vmem [shape: f32[32,1], index: 11, kind: input, shape index: {}]
  %s12 = inlined_call_operand.vmem [shape: f32[8,1], index: 12, kind: input, shape index: {}]
  %s13 = inlined_call_operand.hbm [shape: f32[8,128], index: 13, kind: output, shape index: {}]
  %s14 = sld [smem:[#allocation0]]
  $region66: #{tpu_custom_call.1} parent=0
    _
  %s16 = ssub.s32 1, %s14
  %s17 = scalar_select 0, %s16, %s14
  $region1: #{tpu_custom_call.1} parent=0
    #allocation2 [shape = 'u8[262144]{0}', space=vmem, size = 0x40000, scoped, tag = 'input window, operand 9, single buffered']
    #allocation3 [shape = 's32[1]{0}', space=sflag, size = 0x4, scoped, tag = 'scoped memory for tpu_custom_call.1']
    #allocation4 [shape = 's32[1]{0}', space=sflag, size = 0x4, scoped, tag = 'scoped memory for tpu_custom_call.1']
    #allocation5 [shape = 'u8[4096]{0}', space=vmem, size = 0x1000, scoped, tag = 'output window, operand 0, single buffered']
    %18 = vsyncpa [#allocation3], 0
    %19 = vsyncpa [#allocation4], 0
    // Predicated region
    $region2: #{tpu_custom_call.1} parent=1 // pred_check
      _
    $region3: #{tpu_custom_call.1} parent=1 // pred_check_branch
      %21 = sbr.rel (0) target = $region5
    $region4: #{tpu_custom_call.1} parent=1 // pred_region
      _
    $region5: #{tpu_custom_call.1} parent=1 // pred_fallthru
      _
    // Predicated region
    $region6: #{tpu_custom_call.1} parent=1 // pred_check
      _
    $region7: #{tpu_custom_call.1} parent=1 // pred_check_branch
      %23 = sbr.rel (0) target = $region9
    $region8: #{tpu_custom_call.1} parent=1 // pred_region
      _
    $region9: #{tpu_custom_call.1} parent=1 // pred_fallthru
      _
    // Predicated region
    $region10: #{tpu_custom_call.1} parent=1 // pred_check
      _
    $region11: #{tpu_custom_call.1} parent=1 // pred_check_branch
      %25 = sbr.rel (0) target = $region13
    $region12: #{tpu_custom_call.1} parent=1 // pred_region
      _
    $region13: #{tpu_custom_call.1} parent=1 // pred_fallthru
      _
    // Predicated region
    $region14: #{tpu_custom_call.1} parent=1 // pred_check
      _
    $region15: #{tpu_custom_call.1} parent=1 // pred_check_branch
      %27 = sbr.rel (0) target = $region17
    $region16: #{tpu_custom_call.1} parent=1 // pred_region
      _
    $region17: #{tpu_custom_call.1} parent=1 // pred_fallthru
      _
    // Predicated region
    $region18: #{tpu_custom_call.1} parent=1 // pred_check
      _
    $region19: #{tpu_custom_call.1} parent=1 // pred_check_branch
      %29 = sbr.rel (0) target = $region21
    $region20: #{tpu_custom_call.1} parent=1 // pred_region
      _
    $region21: #{tpu_custom_call.1} parent=1 // pred_fallthru
      _
    // Predicated region
    $region22: #{tpu_custom_call.1} parent=1 // pred_check
      _
    $region23: #{tpu_custom_call.1} parent=1 // pred_check_branch
      %31 = sbr.rel (0) target = $region25
    $region24: #{tpu_custom_call.1} parent=1 // pred_region
      _
    $region25: #{tpu_custom_call.1} parent=1 // pred_fallthru
      _
    // Predicated region
    $region26: #{tpu_custom_call.1} parent=1 // pred_check
      _
    $region27: #{tpu_custom_call.1} parent=1 // pred_check_branch
      %33 = sbr.rel (0) target = $region29
    $region28: #{tpu_custom_call.1} parent=1 // pred_region
      _
    $region29: #{tpu_custom_call.1} parent=1 // pred_fallthru
      _
    // Predicated region
    $region30: #{tpu_custom_call.1} parent=1 // pred_check
      _
    $region31: #{tpu_custom_call.1} parent=1 // pred_check_branch
      %35 = sbr.rel (0) target = $region33
    $region32: #{tpu_custom_call.1} parent=1 // pred_region
      _
    $region33: #{tpu_custom_call.1} parent=1 // pred_fallthru
      _
    // Predicated region
    $region34: #{tpu_custom_call.1} parent=1 // pred_check
      _
    $region35: #{tpu_custom_call.1} parent=1 // pred_check_branch
      %37 = sbr.rel (0) target = $region37
    $region36: #{tpu_custom_call.1} parent=1 // pred_region
      _
    $region37: #{tpu_custom_call.1} parent=1 // pred_fallthru
      _
    // Predicated region
    $region38: #{tpu_custom_call.1} parent=1 // pred_check
      _
    $region39: #{tpu_custom_call.1} parent=1 // pred_check_branch
      %39 = sbr.rel (0) target = $region41
    $region40: #{tpu_custom_call.1} parent=1 // pred_region
      %s41 = ssub.s32 8192, 8192
      %42 = vsyncadd [#allocation3], %s41
      %s43 = sshll.u32 [#allocation2], 4
      %s44 = int_to_ptr.vmem [resolvable:$true] %s43
      %49 = dma.hbm_to_vmem [thread:$0]  %s9, 8192, %s44, [#allocation3], 256, 256, 16
    $region41: #{tpu_custom_call.1} parent=1 // pred_fallthru
      _
    // Predicated region
    $region42: #{tpu_custom_call.1} parent=1 // pred_check
      _
    $region43: #{tpu_custom_call.1} parent=1 // pred_check_branch
      %51 = sbr.rel (0) target = $region45
    $region44: #{tpu_custom_call.1} parent=1 // pred_region
      _
    $region45: #{tpu_custom_call.1} parent=1 // pred_fallthru
      _
    // Predicated region
    $region46: #{tpu_custom_call.1} parent=1 // pred_check
      _
    $region47: #{tpu_custom_call.1} parent=1 // pred_check_branch
      %53 = sbr.rel (0) target = $region49
    $region48: #{tpu_custom_call.1} parent=1 // pred_region
      _
    $region49: #{tpu_custom_call.1} parent=1 // pred_fallthru
      _
    // Predicated region
    $region50: #{tpu_custom_call.1} parent=1 // pred_check
      _
    $region51: #{tpu_custom_call.1} parent=1 // pred_check_branch
      %55 = sbr.rel (0) target = $region53
    $region52: #{tpu_custom_call.1} parent=1 // pred_region
      _
    $region53: #{tpu_custom_call.1} parent=1 // pred_fallthru
      _
    // Predicated region
    $region54: #{tpu_custom_call.1} parent=1 // pred_check
      _
    $region55: #{tpu_custom_call.1} parent=1 // pred_check_branch
      %57 = sbr.rel (0) target = $region57
    $region56: #{tpu_custom_call.1} parent=1 // pred_region
      %58 = dma.done [#allocation3], 8192
    $region57: #{tpu_custom_call.1} parent=1 // pred_fallthru
      _
    %v59 = vld [vmem:[%s1] sm:$0xff]
    %v60 = vld [vmem:[%s1 + $0x8] sm:$0xff]
    %v61 = vld [vmem:[%s1 + $0x10] sm:$0xff]
    %v62 = vld [vmem:[%s1 + $0x18] sm:$0xff]
    %v63 = vld [vmem:[%s1 + $0x20] sm:$0xff]
    %v64 = vld [vmem:[%s1 + $0x28] sm:$0xff]
    %v65 = vld [vmem:[%s1 + $0x30] sm:$0xff]
    %v66 = vld [vmem:[%s1 + $0x38] sm:$0xff]
    %v67 = vld [vmem:[%s1 + $0x40] sm:$0xff]
    %v68 = vld [vmem:[%s1 + $0x48] sm:$0xff]
    %v69 = vld [vmem:[%s1 + $0x50] sm:$0xff]
    %v70 = vld [vmem:[%s1 + $0x58] sm:$0xff]
    %v71 = vld [vmem:[%s1 + $0x60] sm:$0xff]
    %v72 = vld [vmem:[%s1 + $0x68] sm:$0xff]
    %v73 = vld [vmem:[%s1 + $0x70] sm:$0xff]
    %v74 = vld [vmem:[%s1 + $0x78] sm:$0xff]
    %v75 = vld [vmem:[%s1 + $0x80] sm:$0xff]
    %v76 = vld [vmem:[%s1 + $0x88] sm:$0xff]
    %v77 = vld [vmem:[%s1 + $0x90] sm:$0xff]
    %v78 = vld [vmem:[%s1 + $0x98] sm:$0xff]
    %v79 = vld [vmem:[%s1 + $0xa0] sm:$0xff]
    %v80 = vld [vmem:[%s1 + $0xa8] sm:$0xff]
    %v81 = vld [vmem:[%s1 + $0xb0] sm:$0xff]
    %v82 = vld [vmem:[%s1 + $0xb8] sm:$0xff]
    %v83 = vld [vmem:[%s1 + $0xc0] sm:$0xff]
    %v84 = vld [vmem:[%s1 + $0xc8] sm:$0xff]
    %v85 = vld [vmem:[%s1 + $0xd0] sm:$0xff]
    %v86 = vld [vmem:[%s1 + $0xd8] sm:$0xff]
    %v87 = vld [vmem:[%s1 + $0xe0] sm:$0xff]
    %v88 = vld [vmem:[%s1 + $0xe8] sm:$0xff]
    %v89 = vld [vmem:[%s1 + $0xf0] sm:$0xff]
    %v90 = vld [vmem:[%s1 + $0xf8] sm:$0xff]
    %v91 = vld [vmem:[%s0] sm:$0xff]
    %v92 = vld [vmem:[%s0 + $0x8] sm:$0xff]
    %v93 = vld [vmem:[%s0 + $0x10] sm:$0xff]
    %v94 = vld [vmem:[%s0 + $0x18] sm:$0xff]
    %v95 = vld [vmem:[%s2] sm:$0xff]
    %v96 = vld [vmem:[%s2 + $0x8] sm:$0xff]
    %v97 = vld [vmem:[%s2 + $0x10] sm:$0xff]
    %v98 = vld [vmem:[%s2 + $0x18] sm:$0xff]
    %v99 = vld [vmem:[%s2 + $0x20] sm:$0xff]
    %v100 = vld [vmem:[%s2 + $0x28] sm:$0xff]
    %v101 = vld [vmem:[%s2 + $0x30] sm:$0xff]
    %v102 = vld [vmem:[%s2 + $0x38] sm:$0xff]
    %v103 = vld [vmem:[%s2 + $0x40] sm:$0xff]
    %v104 = vld [vmem:[%s2 + $0x48] sm:$0xff]
    %v105 = vld [vmem:[%s2 + $0x50] sm:$0xff]
    %v106 = vld [vmem:[%s2 + $0x58] sm:$0xff]
    %v107 = vld [vmem:[%s2 + $0x60] sm:$0xff]
    %v108 = vld [vmem:[%s2 + $0x68] sm:$0xff]
    %v109 = vld [vmem:[%s2 + $0x70] sm:$0xff]
    %v110 = vld [vmem:[%s2 + $0x78] sm:$0xff]
    %v111 = vld [vmem:[%s2 + $0x80] sm:$0xff]
    %v112 = vld [vmem:[%s2 + $0x88] sm:$0xff]
    %v113 = vld [vmem:[%s2 + $0x90] sm:$0xff]
    %v114 = vld [vmem:[%s2 + $0x98] sm:$0xff]
    %v115 = vld [vmem:[%s2 + $0xa0] sm:$0xff]
    %v116 = vld [vmem:[%s2 + $0xa8] sm:$0xff]
    %v117 = vld [vmem:[%s2 + $0xb0] sm:$0xff]
    %v118 = vld [vmem:[%s2 + $0xb8] sm:$0xff]
    %v119 = vld [vmem:[%s2 + $0xc0] sm:$0xff]
    %v120 = vld [vmem:[%s2 + $0xc8] sm:$0xff]
    %v121 = vld [vmem:[%s2 + $0xd0] sm:$0xff]
    %v122 = vld [vmem:[%s2 + $0xd8] sm:$0xff]
    %v123 = vld [vmem:[%s2 + $0xe0] sm:$0xff]
    %v124 = vld [vmem:[%s2 + $0xe8] sm:$0xff]
    %v125 = vld [vmem:[%s2 + $0xf0] sm:$0xff]
    %v126 = vld [vmem:[%s2 + $0xf8] sm:$0xff]
    %128 = vset.pattern.permute.xlu0 0
    %129 = vperm.xlu0 %128, %v95
    %v130 = vpop.permute.xlu0 %129
    %133 = vset.pattern.permute.xlu0 0
    %134 = vperm.xlu0 %133, %v96
    %v135 = vpop.permute.xlu0 %134
    %138 = vset.pattern.permute.xlu0 0
    %139 = vperm.xlu0 %138, %v97
    %v140 = vpop.permute.xlu0 %139
    %143 = vset.pattern.permute.xlu0 0
    %144 = vperm.xlu0 %143, %v98
    %v145 = vpop.permute.xlu0 %144
    %148 = vset.pattern.permute.xlu0 0
    %149 = vperm.xlu0 %148, %v99
    %v150 = vpop.permute.xlu0 %149
    %153 = vset.pattern.permute.xlu0 0
    %154 = vperm.xlu0 %153, %v100
    %v155 = vpop.permute.xlu0 %154
    %158 = vset.pattern.permute.xlu0 0
    %159 = vperm.xlu0 %158, %v101
    %v160 = vpop.permute.xlu0 %159
    %163 = vset.pattern.permute.xlu0 0
    %164 = vperm.xlu0 %163, %v102
    %v165 = vpop.permute.xlu0 %164
    %168 = vset.pattern.permute.xlu0 0
    %169 = vperm.xlu0 %168, %v103
    %v170 = vpop.permute.xlu0 %169
    %173 = vset.pattern.permute.xlu0 0
    %174 = vperm.xlu0 %173, %v104
    %v175 = vpop.permute.xlu0 %174
    %178 = vset.pattern.permute.xlu0 0
    %179 = vperm.xlu0 %178, %v105
    %v180 = vpop.permute.xlu0 %179
    %183 = vset.pattern.permute.xlu0 0
    %184 = vperm.xlu0 %183, %v106
    %v185 = vpop.permute.xlu0 %184
    %188 = vset.pattern.permute.xlu0 0
    %189 = vperm.xlu0 %188, %v107
    %v190 = vpop.permute.xlu0 %189
    %193 = vset.pattern.permute.xlu0 0
    %194 = vperm.xlu0 %193, %v108
    %v195 = vpop.permute.xlu0 %194
    %198 = vset.pattern.permute.xlu0 0
    %199 = vperm.xlu0 %198, %v109
    %v200 = vpop.permute.xlu0 %199
    %203 = vset.pattern.permute.xlu0 0
    %204 = vperm.xlu0 %203, %v110
    %v205 = vpop.permute.xlu0 %204
    %208 = vset.pattern.permute.xlu0 0
    %209 = vperm.xlu0 %208, %v111
    %v210 = vpop.permute.xlu0 %209
    %213 = vset.pattern.permute.xlu0 0
    %214 = vperm.xlu0 %213, %v112
    %v215 = vpop.permute.xlu0 %214
    %218 = vset.pattern.permute.xlu0 0
    %219 = vperm.xlu0 %218, %v113
    %v220 = vpop.permute.xlu0 %219
    %223 = vset.pattern.permute.xlu0 0
    %224 = vperm.xlu0 %223, %v114
    %v225 = vpop.permute.xlu0 %224
    %228 = vset.pattern.permute.xlu0 0
    %229 = vperm.xlu0 %228, %v115
    %v230 = vpop.permute.xlu0 %229
    %233 = vset.pattern.permute.xlu0 0
    %234 = vperm.xlu0 %233, %v116
    %v235 = vpop.permute.xlu0 %234
    %238 = vset.pattern.permute.xlu0 0
    %239 = vperm.xlu0 %238, %v117
    %v240 = vpop.permute.xlu0 %239
    %243 = vset.pattern.permute.xlu0 0
    %244 = vperm.xlu0 %243, %v118
    %v245 = vpop.permute.xlu0 %244
    %248 = vset.pattern.permute.xlu0 0
    %249 = vperm.xlu0 %248, %v119
    %v250 = vpop.permute.xlu0 %249
    %253 = vset.pattern.permute.xlu0 0
    %254 = vperm.xlu0 %253, %v120
    %v255 = vpop.permute.xlu0 %254
    %258 = vset.pattern.permute.xlu0 0
    %259 = vperm.xlu0 %258, %v121
    %v260 = vpop.permute.xlu0 %259
    %263 = vset.pattern.permute.xlu0 0
    %264 = vperm.xlu0 %263, %v122
    %v265 = vpop.permute.xlu0 %264
    %268 = vset.pattern.permute.xlu0 0
    %269 = vperm.xlu0 %268, %v123
    %v270 = vpop.permute.xlu0 %269
    %273 = vset.pattern.permute.xlu0 0
    %274 = vperm.xlu0 %273, %v124
    %v275 = vpop.permute.xlu0 %274
    %278 = vset.pattern.permute.xlu0 0
    %279 = vperm.xlu0 %278, %v125
    %v280 = vpop.permute.xlu0 %279
    %283 = vset.pattern.permute.xlu0 0
    %284 = vperm.xlu0 %283, %v126
    %v285 = vpop.permute.xlu0 %284
    %vm287 = vcmask 261120
    %v289 = vsel %vm287, %v59, 0
    %v292 = vsel %vm287, %v60, 0
    %v295 = vsel %vm287, %v61, 0
    %v298 = vsel %vm287, %v62, 0
    %v301 = vsel %vm287, %v63, 0
    %v304 = vsel %vm287, %v64, 0
    %v307 = vsel %vm287, %v65, 0
    %v310 = vsel %vm287, %v66, 0
    %v313 = vsel %vm287, %v67, 0
    %v316 = vsel %vm287, %v68, 0
    %v319 = vsel %vm287, %v69, 0
    %v322 = vsel %vm287, %v70, 0
    %v325 = vsel %vm287, %v71, 0
    %v328 = vsel %vm287, %v72, 0
    %v331 = vsel %vm287, %v73, 0
    %v334 = vsel %vm287, %v74, 0
    %v337 = vsel %vm287, %v75, 0
    %v340 = vsel %vm287, %v76, 0
    %v343 = vsel %vm287, %v77, 0
    %v346 = vsel %vm287, %v78, 0
    %v349 = vsel %vm287, %v79, 0
    %v352 = vsel %vm287, %v80, 0
    %v355 = vsel %vm287, %v81, 0
    %v358 = vsel %vm287, %v82, 0
    %v361 = vsel %vm287, %v83, 0
    %v364 = vsel %vm287, %v84, 0
    %v367 = vsel %vm287, %v85, 0
    %v370 = vsel %vm287, %v86, 0
    %v373 = vsel %vm287, %v87, 0
    %v376 = vsel %vm287, %v88, 0
    %v379 = vsel %vm287, %v89, 0
    %v382 = vsel %vm287, %v90, 0
    %384 = vmatprep.subr.mxu0 0.0
    %385 = vmatpush1.msra.mxu0 %v91
    %386 = vmatprep.subr.mxu0 0.0
    %387 = vmatpush1.msra.mxu0 %v92
    %388 = vmatprep.subr.mxu0 0.0
    %389 = vmatpush1.msra.mxu0 %v93
    %390 = vmatprep.subr.mxu0 0.0
    %391 = vmatpush1.msra.mxu0 %v94
    %392 = vmatprep.subr.mxu0 0.0
    %393 = vmatpush1.msra.mxu0 0.0
    %394 = vmatprep.subr.mxu0 0.0
    %395 = vmatpush1.msra.mxu0 0.0
    %396 = vmatprep.subr.mxu0 0.0
    %397 = vmatpush1.msra.mxu0 0.0
    %398 = vmatprep.subr.mxu0 0.0
    %399 = vmatpush1.msra.mxu0 0.0
    %400 = vmatprep.subr.mxu0 0.0
    %401 = vmatpush1.msra.mxu0 0.0
    %402 = vmatprep.subr.mxu0 0.0
    %403 = vmatpush1.msra.mxu0 0.0
    %404 = vmatprep.subr.mxu0 0.0
    %405 = vmatpush1.msra.mxu0 0.0
    %406 = vmatprep.subr.mxu0 0.0
    %407 = vmatpush1.msra.mxu0 0.0
    %408 = vmatprep.subr.mxu0 0.0
    %409 = vmatpush1.msra.mxu0 0.0
    %410 = vmatprep.subr.mxu0 0.0
    %411 = vmatpush1.msra.mxu0 0.0
    %412 = vmatprep.subr.mxu0 0.0
    %413 = vmatpush1.msra.mxu0 0.0
    %414 = vmatprep.subr.mxu0 0.0
    %415 = vmatpush1.msra.mxu0 0.0
    %416 = vmatprep.subr.mxu0 0.0
    %417 = vmatpush1.msra.mxu0 0.0
    %418 = vmatprep.subr.mxu0 0.0
    %419 = vmatpush1.msra.mxu0 0.0
    %420 = vmatprep.subr.mxu0 0.0
    %421 = vmatpush1.msra.mxu0 0.0
    %422 = vmatprep.subr.mxu0 0.0
    %423 = vmatpush1.msra.mxu0 0.0
    %424 = vmatprep.subr.mxu0 0.0
    %425 = vmatpush1.msra.mxu0 0.0
    %426 = vmatprep.subr.mxu0 0.0
    %427 = vmatpush1.msra.mxu0 0.0
    %428 = vmatprep.subr.mxu0 0.0
    %429 = vmatpush1.msra.mxu0 0.0
    %430 = vmatprep.subr.mxu0 0.0
    %431 = vmatpush1.msra.mxu0 0.0
    %432 = vmatprep.subr.mxu0 0.0
    %433 = vmatpush1.msra.mxu0 0.0
    %434 = vmatprep.subr.mxu0 0.0
    %435 = vmatpush1.msra.mxu0 0.0
    %436 = vmatprep.subr.mxu0 0.0
    %437 = vmatpush1.msra.mxu0 0.0
    %438 = vmatprep.subr.mxu0 0.0
    %439 = vmatpush1.msra.mxu0 0.0
    %440 = vmatprep.subr.mxu0 0.0
    %441 = vmatpush1.msra.mxu0 0.0
    %442 = vmatprep.subr.mxu0 0.0
    %443 = vmatpush1.msra.mxu0 0.0
    %444 = vmatprep.subr.mxu0 0.0
    %445 = vmatpush1.msra.mxu0 0.0
    %446 = vmatprep.subr.mxu0 0.0
    %447 = vmatpush1.msra.mxu0 0.0
    %448 = vmatprep.mubr.f32.mxu0 0.0
    %449 = vmatmul.mubr.f32.gmra.mrb[0].mxu0 %v289
    %v450 = vpop.f32.mrb[0].mxu0
    %v451 = vadd.f32 %v130, %v450
    %v452 = vpop.f32.mrb[0].mxu0
    %453 = vmatprep.mubr.f32.mxu0 0.0
    %454 = vmatmul.mubr.f32.gmra.mrb[0].mxu0 %v292
    %v455 = vpop.f32.mrb[0].mxu0
    %v456 = vadd.f32 %v135, %v455
    %v457 = vpop.f32.mrb[0].mxu0
    %458 = vmatprep.mubr.f32.mxu0 0.0
    %459 = vmatmul.mubr.f32.gmra.mrb[0].mxu0 %v295
    %v460 = vpop.f32.mrb[0].mxu0
    %v461 = vadd.f32 %v140, %v460
    %v462 = vpop.f32.mrb[0].mxu0
    %463 = vmatprep.mubr.f32.mxu0 0.0
    %464 = vmatmul.mubr.f32.gmra.mrb[0].mxu0 %v298
    %v465 = vpop.f32.mrb[0].mxu0
    %v466 = vadd.f32 %v145, %v465
    %v467 = vpop.f32.mrb[0].mxu0
    %468 = vmatprep.mubr.f32.mxu0 0.0
    %469 = vmatmul.mubr.f32.gmra.mrb[0].mxu0 %v301
    %v470 = vpop.f32.mrb[0].mxu0
    %v471 = vadd.f32 %v150, %v470
    %v472 = vpop.f32.mrb[0].mxu0
    %473 = vmatprep.mubr.f32.mxu0 0.0
    %474 = vmatmul.mubr.f32.gmra.mrb[0].mxu0 %v304
    %v475 = vpop.f32.mrb[0].mxu0
    %v476 = vadd.f32 %v155, %v475
    %v477 = vpop.f32.mrb[0].mxu0
    %478 = vmatprep.mubr.f32.mxu0 0.0
    %479 = vmatmul.mubr.f32.gmra.mrb[0].mxu0 %v307
    %v480 = vpop.f32.mrb[0].mxu0
    %v481 = vadd.f32 %v160, %v480
    %v482 = vpop.f32.mrb[0].mxu0
    %483 = vmatprep.mubr.f32.mxu0 0.0
    %484 = vmatmul.mubr.f32.gmra.mrb[0].mxu0 %v310
    %v485 = vpop.f32.mrb[0].mxu0
    %v486 = vadd.f32 %v165, %v485
    %v487 = vpop.f32.mrb[0].mxu0
    %488 = vmatprep.mubr.f32.mxu0 0.0
    %489 = vmatmul.mubr.f32.gmra.mrb[0].mxu0 %v313
    %v490 = vpop.f32.mrb[0].mxu0
    %v491 = vadd.f32 %v170, %v490
    %v492 = vpop.f32.mrb[0].mxu0
    %493 = vmatprep.mubr.f32.mxu0 0.0
    %494 = vmatmul.mubr.f32.gmra.mrb[0].mxu0 %v316
    %v495 = vpop.f32.mrb[0].mxu0
    %v496 = vadd.f32 %v175, %v495
    %v497 = vpop.f32.mrb[0].mxu0
    %498 = vmatprep.mubr.f32.mxu0 0.0
    %499 = vmatmul.mubr.f32.gmra.mrb[0].mxu0 %v319
    %v500 = vpop.f32.mrb[0].mxu0
    %v501 = vadd.f32 %v180, %v500
    %v502 = vpop.f32.mrb[0].mxu0
    %503 = vmatprep.mubr.f32.mxu0 0.0
    %504 = vmatmul.mubr.f32.gmra.mrb[0].mxu0 %v322
    %v505 = vpop.f32.mrb[0].mxu0
    %v506 = vadd.f32 %v185, %v505
    %v507 = vpop.f32.mrb[0].mxu0
    %508 = vmatprep.mubr.f32.mxu0 0.0
    %509 = vmatmul.mubr.f32.gmra.mrb[0].mxu0 %v325
    %v510 = vpop.f32.mrb[0].mxu0
    %v511 = vadd.f32 %v190, %v510
    %v512 = vpop.f32.mrb[0].mxu0
    %513 = vmatprep.mubr.f32.mxu0 0.0
    %514 = vmatmul.mubr.f32.gmra.mrb[0].mxu0 %v328
    %v515 = vpop.f32.mrb[0].mxu0
    %v516 = vadd.f32 %v195, %v515
    %v517 = vpop.f32.mrb[0].mxu0
    %518 = vmatprep.mubr.f32.mxu0 0.0
    %519 = vmatmul.mubr.f32.gmra.mrb[0].mxu0 %v331
    %v520 = vpop.f32.mrb[0].mxu0
    %v521 = vadd.f32 %v200, %v520
    %v522 = vpop.f32.mrb[0].mxu0
    %523 = vmatprep.mubr.f32.mxu0 0.0
    %524 = vmatmul.mubr.f32.gmra.mrb[0].mxu0 %v334
    %v525 = vpop.f32.mrb[0].mxu0
    %v526 = vadd.f32 %v205, %v525
    %v527 = vpop.f32.mrb[0].mxu0
    %528 = vmatprep.mubr.f32.mxu0 0.0
    %529 = vmatmul.mubr.f32.gmra.mrb[0].mxu0 %v337
    %v530 = vpop.f32.mrb[0].mxu0
    %v531 = vadd.f32 %v210, %v530
    %v532 = vpop.f32.mrb[0].mxu0
    %533 = vmatprep.mubr.f32.mxu0 0.0
    %534 = vmatmul.mubr.f32.gmra.mrb[0].mxu0 %v340
    %v535 = vpop.f32.mrb[0].mxu0
    %v536 = vadd.f32 %v215, %v535
    %v537 = vpop.f32.mrb[0].mxu0
    %538 = vmatprep.mubr.f32.mxu0 0.0
    %539 = vmatmul.mubr.f32.gmra.mrb[0].mxu0 %v343
    %v540 = vpop.f32.mrb[0].mxu0
    %v541 = vadd.f32 %v220, %v540
    %v542 = vpop.f32.mrb[0].mxu0
    %543 = vmatprep.mubr.f32.mxu0 0.0
    %544 = vmatmul.mubr.f32.gmra.mrb[0].mxu0 %v346
    %v545 = vpop.f32.mrb[0].mxu0
    %v546 = vadd.f32 %v225, %v545
    %v547 = vpop.f32.mrb[0].mxu0
    %548 = vmatprep.mubr.f32.mxu0 0.0
    %549 = vmatmul.mubr.f32.gmra.mrb[0].mxu0 %v349
    %v550 = vpop.f32.mrb[0].mxu0
    %v551 = vadd.f32 %v230, %v550
    %v552 = vpop.f32.mrb[0].mxu0
    %553 = vmatprep.mubr.f32.mxu0 0.0
    %554 = vmatmul.mubr.f32.gmra.mrb[0].mxu0 %v352
    %v555 = vpop.f32.mrb[0].mxu0
    %v556 = vadd.f32 %v235, %v555
    %v557 = vpop.f32.mrb[0].mxu0
    %558 = vmatprep.mubr.f32.mxu0 0.0
    %559 = vmatmul.mubr.f32.gmra.mrb[0].mxu0 %v355
    %v560 = vpop.f32.mrb[0].mxu0
    %v561 = vadd.f32 %v240, %v560
    %v562 = vpop.f32.mrb[0].mxu0
    %563 = vmatprep.mubr.f32.mxu0 0.0
    %564 = vmatmul.mubr.f32.gmra.mrb[0].mxu0 %v358
    %v565 = vpop.f32.mrb[0].mxu0
    %v566 = vadd.f32 %v245, %v565
    %v567 = vpop.f32.mrb[0].mxu0
    %568 = vmatprep.mubr.f32.mxu0 0.0
    %569 = vmatmul.mubr.f32.gmra.mrb[0].mxu0 %v361
    %v570 = vpop.f32.mrb[0].mxu0
    %v571 = vadd.f32 %v250, %v570
    %v572 = vpop.f32.mrb[0].mxu0
    %573 = vmatprep.mubr.f32.mxu0 0.0
    %574 = vmatmul.mubr.f32.gmra.mrb[0].mxu0 %v364
    %v575 = vpop.f32.mrb[0].mxu0
    %v576 = vadd.f32 %v255, %v575
    %v577 = vpop.f32.mrb[0].mxu0
    %578 = vmatprep.mubr.f32.mxu0 0.0
    %579 = vmatmul.mubr.f32.gmra.mrb[0].mxu0 %v367
    %v580 = vpop.f32.mrb[0].mxu0
    %v581 = vadd.f32 %v260, %v580
    %v582 = vpop.f32.mrb[0].mxu0
    %583 = vmatprep.mubr.f32.mxu0 0.0
    %584 = vmatmul.mubr.f32.gmra.mrb[0].mxu0 %v370
    %v585 = vpop.f32.mrb[0].mxu0
    %v586 = vadd.f32 %v265, %v585
    %v587 = vpop.f32.mrb[0].mxu0
    %588 = vmatprep.mubr.f32.mxu0 0.0
    %589 = vmatmul.mubr.f32.gmra.mrb[0].mxu0 %v373
    %v590 = vpop.f32.mrb[0].mxu0
    %v591 = vadd.f32 %v270, %v590
    %v592 = vpop.f32.mrb[0].mxu0
    %593 = vmatprep.mubr.f32.mxu0 0.0
    %594 = vmatmul.mubr.f32.gmra.mrb[0].mxu0 %v376
    %v595 = vpop.f32.mrb[0].mxu0
    %v596 = vadd.f32 %v275, %v595
    %v597 = vpop.f32.mrb[0].mxu0
    %598 = vmatprep.mubr.f32.mxu0 0.0
    %599 = vmatmul.mubr.f32.gmra.mrb[0].mxu0 %v379
    %v600 = vpop.f32.mrb[0].mxu0
    %v601 = vadd.f32 %v280, %v600
    %v602 = vpop.f32.mrb[0].mxu0
    %603 = vmatprep.mubr.f32.mxu0 0.0
    %604 = vmatmul.mubr.f32.gmra.mrb[0].mxu0 %v382
    %v605 = vpop.f32.mrb[0].mxu0
    %v606 = vadd.f32 %v285, %v605
    %v607 = vpop.f32.mrb[0].mxu0
    %608 = vdwg.mxu0
    %v609 = vtanh.pop %v451
    %v610 = vtanh.pop %v456
    %v611 = vtanh.pop %v461
    %v612 = vtanh.pop %v466
    %v613 = vtanh.pop %v471
    %v614 = vtanh.pop %v476
    %v615 = vtanh.pop %v481
    %v616 = vtanh.pop %v486
    %v617 = vtanh.pop %v491
    %v618 = vtanh.pop %v496
    %v619 = vtanh.pop %v501
    %v620 = vtanh.pop %v506
    %v621 = vtanh.pop %v511
    %v622 = vtanh.pop %v516
    %v623 = vtanh.pop %v521
    %v624 = vtanh.pop %v526
    %v625 = vtanh.pop %v531
    %v626 = vtanh.pop %v536
    %v627 = vtanh.pop %v541
    %v628 = vtanh.pop %v546
    %v629 = vtanh.pop %v551
    %v630 = vtanh.pop %v556
    %v631 = vtanh.pop %v561
    %v632 = vtanh.pop %v566
    %v633 = vtanh.pop %v571
    %v634 = vtanh.pop %v576
    %v635 = vtanh.pop %v581
    %v636 = vtanh.pop %v586
    %v637 = vtanh.pop %v591
    %v638 = vtanh.pop %v596
    %v639 = vtanh.pop %v601
    %v640 = vtanh.pop %v606
    %v641 = vld [vmem:[%s3] sm:$0xff]
    %v642 = vld [vmem:[%s3 + $0x8] sm:$0xff]
    %v643 = vld [vmem:[%s3 + $0x10] sm:$0xff]
    %v644 = vld [vmem:[%s3 + $0x18] sm:$0xff]
    %v645 = vld [vmem:[%s3 + $0x20] sm:$0xff]
    %v646 = vld [vmem:[%s3 + $0x28] sm:$0xff]
    %v647 = vld [vmem:[%s3 + $0x30] sm:$0xff]
    %v648 = vld [vmem:[%s3 + $0x38] sm:$0xff]
    %v649 = vld [vmem:[%s3 + $0x40] sm:$0xff]
    %v650 = vld [vmem:[%s3 + $0x48] sm:$0xff]
    %v651 = vld [vmem:[%s3 + $0x50] sm:$0xff]
    %v652 = vld [vmem:[%s3 + $0x58] sm:$0xff]
    %v653 = vld [vmem:[%s3 + $0x60] sm:$0xff]
    %v654 = vld [vmem:[%s3 + $0x68] sm:$0xff]
    %v655 = vld [vmem:[%s3 + $0x70] sm:$0xff]
    %v656 = vld [vmem:[%s3 + $0x78] sm:$0xff]
    %v657 = vld [vmem:[%s3 + $0x80] sm:$0xff]
    %v658 = vld [vmem:[%s3 + $0x88] sm:$0xff]
    %v659 = vld [vmem:[%s3 + $0x90] sm:$0xff]
    %v660 = vld [vmem:[%s3 + $0x98] sm:$0xff]
    %v661 = vld [vmem:[%s3 + $0xa0] sm:$0xff]
    %v662 = vld [vmem:[%s3 + $0xa8] sm:$0xff]
    %v663 = vld [vmem:[%s3 + $0xb0] sm:$0xff]
    %v664 = vld [vmem:[%s3 + $0xb8] sm:$0xff]
    %v665 = vld [vmem:[%s3 + $0xc0] sm:$0xff]
    %v666 = vld [vmem:[%s3 + $0xc8] sm:$0xff]
    %v667 = vld [vmem:[%s3 + $0xd0] sm:$0xff]
    %v668 = vld [vmem:[%s3 + $0xd8] sm:$0xff]
    %v669 = vld [vmem:[%s3 + $0xe0] sm:$0xff]
    %v670 = vld [vmem:[%s3 + $0xe8] sm:$0xff]
    %v671 = vld [vmem:[%s3 + $0xf0] sm:$0xff]
    %v672 = vld [vmem:[%s3 + $0xf8] sm:$0xff]
    %v673 = vld [vmem:[%s3 + $0x100] sm:$0xff]
    %v674 = vld [vmem:[%s3 + $0x108] sm:$0xff]
    %v675 = vld [vmem:[%s3 + $0x110] sm:$0xff]
    %v676 = vld [vmem:[%s3 + $0x118] sm:$0xff]
    %v677 = vld [vmem:[%s3 + $0x120] sm:$0xff]
    %v678 = vld [vmem:[%s3 + $0x128] sm:$0xff]
    %v679 = vld [vmem:[%s3 + $0x130] sm:$0xff]
    %v680 = vld [vmem:[%s3 + $0x138] sm:$0xff]
    %v681 = vld [vmem:[%s3 + $0x140] sm:$0xff]
    %v682 = vld [vmem:[%s3 + $0x148] sm:$0xff]
    %v683 = vld [vmem:[%s3 + $0x150] sm:$0xff]
    %v684 = vld [vmem:[%s3 + $0x158] sm:$0xff]
    %v685 = vld [vmem:[%s3 + $0x160] sm:$0xff]
    %v686 = vld [vmem:[%s3 + $0x168] sm:$0xff]
    %v687 = vld [vmem:[%s3 + $0x170] sm:$0xff]
    %v688 = vld [vmem:[%s3 + $0x178] sm:$0xff]
    %v689 = vld [vmem:[%s3 + $0x180] sm:$0xff]
    %v690 = vld [vmem:[%s3 + $0x188] sm:$0xff]
    %v691 = vld [vmem:[%s3 + $0x190] sm:$0xff]
    %v692 = vld [vmem:[%s3 + $0x198] sm:$0xff]
    %v693 = vld [vmem:[%s3 + $0x1a0] sm:$0xff]
    %v694 = vld [vmem:[%s3 + $0x1a8] sm:$0xff]
    %v695 = vld [vmem:[%s3 + $0x1b0] sm:$0xff]
    %v696 = vld [vmem:[%s3 + $0x1b8] sm:$0xff]
    %v697 = vld [vmem:[%s3 + $0x1c0] sm:$0xff]
    %v698 = vld [vmem:[%s3 + $0x1c8] sm:$0xff]
    %v699 = vld [vmem:[%s3 + $0x1d0] sm:$0xff]
    %v700 = vld [vmem:[%s3 + $0x1d8] sm:$0xff]
    %v701 = vld [vmem:[%s3 + $0x1e0] sm:$0xff]
    %v702 = vld [vmem:[%s3 + $0x1e8] sm:$0xff]
    %v703 = vld [vmem:[%s3 + $0x1f0] sm:$0xff]
    %v704 = vld [vmem:[%s3 + $0x1f8] sm:$0xff]
    %v705 = vld [vmem:[%s4] sm:$0xff]
    %v706 = vld [vmem:[%s4 + $0x8] sm:$0xff]
    %v707 = vld [vmem:[%s4 + $0x10] sm:$0xff]
    %v708 = vld [vmem:[%s4 + $0x18] sm:$0xff]
    %v709 = vld [vmem:[%s4 + $0x20] sm:$0xff]
    %v710 = vld [vmem:[%s4 + $0x28] sm:$0xff]
    %v711 = vld [vmem:[%s4 + $0x30] sm:$0xff]
    %v712 = vld [vmem:[%s4 + $0x38] sm:$0xff]
    %v713 = vld [vmem:[%s4 + $0x40] sm:$0xff]
    %v714 = vld [vmem:[%s4 + $0x48] sm:$0xff]
    %v715 = vld [vmem:[%s4 + $0x50] sm:$0xff]
    %v716 = vld [vmem:[%s4 + $0x58] sm:$0xff]
    %v717 = vld [vmem:[%s4 + $0x60] sm:$0xff]
    %v718 = vld [vmem:[%s4 + $0x68] sm:$0xff]
    %v719 = vld [vmem:[%s4 + $0x70] sm:$0xff]
    %v720 = vld [vmem:[%s4 + $0x78] sm:$0xff]
    %v721 = vld [vmem:[%s4 + $0x80] sm:$0xff]
    %v722 = vld [vmem:[%s4 + $0x88] sm:$0xff]
    %v723 = vld [vmem:[%s4 + $0x90] sm:$0xff]
    %v724 = vld [vmem:[%s4 + $0x98] sm:$0xff]
    %v725 = vld [vmem:[%s4 + $0xa0] sm:$0xff]
    %v726 = vld [vmem:[%s4 + $0xa8] sm:$0xff]
    %v727 = vld [vmem:[%s4 + $0xb0] sm:$0xff]
    %v728 = vld [vmem:[%s4 + $0xb8] sm:$0xff]
    %v729 = vld [vmem:[%s4 + $0xc0] sm:$0xff]
    %v730 = vld [vmem:[%s4 + $0xc8] sm:$0xff]
    %v731 = vld [vmem:[%s4 + $0xd0] sm:$0xff]
    %v732 = vld [vmem:[%s4 + $0xd8] sm:$0xff]
    %v733 = vld [vmem:[%s4 + $0xe0] sm:$0xff]
    %v734 = vld [vmem:[%s4 + $0xe8] sm:$0xff]
    %v735 = vld [vmem:[%s4 + $0xf0] sm:$0xff]
    %v736 = vld [vmem:[%s4 + $0xf8] sm:$0xff]
    %738 = vset.pattern.permute.xlu0 0
    %739 = vperm.xlu0 %738, %v705
    %v740 = vpop.permute.xlu0 %739
    %743 = vset.pattern.permute.xlu0 0
    %744 = vperm.xlu0 %743, %v706
    %v745 = vpop.permute.xlu0 %744
    %748 = vset.pattern.permute.xlu0 0
    %749 = vperm.xlu0 %748, %v707
    %v750 = vpop.permute.xlu0 %749
    %753 = vset.pattern.permute.xlu0 0
    %754 = vperm.xlu0 %753, %v708
    %v755 = vpop.permute.xlu0 %754
    %758 = vset.pattern.permute.xlu0 0
    %759 = vperm.xlu0 %758, %v709
    %v760 = vpop.permute.xlu0 %759
    %763 = vset.pattern.permute.xlu0 0
    %764 = vperm.xlu0 %763, %v710
    %v765 = vpop.permute.xlu0 %764
    %768 = vset.pattern.permute.xlu0 0
    %769 = vperm.xlu0 %768, %v711
    %v770 = vpop.permute.xlu0 %769
    %773 = vset.pattern.permute.xlu0 0
    %774 = vperm.xlu0 %773, %v712
    %v775 = vpop.permute.xlu0 %774
    %778 = vset.pattern.permute.xlu0 0
    %779 = vperm.xlu0 %778, %v713
    %v780 = vpop.permute.xlu0 %779
    %783 = vset.pattern.permute.xlu0 0
    %784 = vperm.xlu0 %783, %v714
    %v785 = vpop.permute.xlu0 %784
    %788 = vset.pattern.permute.xlu0 0
    %789 = vperm.xlu0 %788, %v715
    %v790 = vpop.permute.xlu0 %789
    %793 = vset.pattern.permute.xlu0 0
    %794 = vperm.xlu0 %793, %v716
    %v795 = vpop.permute.xlu0 %794
    %798 = vset.pattern.permute.xlu0 0
    %799 = vperm.xlu0 %798, %v717
    %v800 = vpop.permute.xlu0 %799
    %803 = vset.pattern.permute.xlu0 0
    %804 = vperm.xlu0 %803, %v718
    %v805 = vpop.permute.xlu0 %804
    %808 = vset.pattern.permute.xlu0 0
    %809 = vperm.xlu0 %808, %v719
    %v810 = vpop.permute.xlu0 %809
    %813 = vset.pattern.permute.xlu0 0
    %814 = vperm.xlu0 %813, %v720
    %v815 = vpop.permute.xlu0 %814
    %818 = vset.pattern.permute.xlu0 0
    %819 = vperm.xlu0 %818, %v721
    %v820 = vpop.permute.xlu0 %819
    %823 = vset.pattern.permute.xlu0 0
    %824 = vperm.xlu0 %823, %v722
    %v825 = vpop.permute.xlu0 %824
    %828 = vset.pattern.permute.xlu0 0
    %829 = vperm.xlu0 %828, %v723
    %v830 = vpop.permute.xlu0 %829
    %833 = vset.pattern.permute.xlu0 0
    %834 = vperm.xlu0 %833, %v724
    %v835 = vpop.permute.xlu0 %834
    %838 = vset.pattern.permute.xlu0 0
    %839 = vperm.xlu0 %838, %v725
    %v840 = vpop.permute.xlu0 %839
    %843 = vset.pattern.permute.xlu0 0
    %844 = vperm.xlu0 %843, %v726
    %v845 = vpop.permute.xlu0 %844
    %848 = vset.pattern.permute.xlu0 0
    %849 = vperm.xlu0 %848, %v727
    %v850 = vpop.permute.xlu0 %849
    %853 = vset.pattern.permute.xlu0 0
    %854 = vperm.xlu0 %853, %v728
    %v855 = vpop.permute.xlu0 %854
    %858 = vset.pattern.permute.xlu0 0
    %859 = vperm.xlu0 %858, %v729
    %v860 = vpop.permute.xlu0 %859
    %863 = vset.pattern.permute.xlu0 0
    %864 = vperm.xlu0 %863, %v730
    %v865 = vpop.permute.xlu0 %864
    %868 = vset.pattern.permute.xlu0 0
    %869 = vperm.xlu0 %868, %v731
    %v870 = vpop.permute.xlu0 %869
    %873 = vset.pattern.permute.xlu0 0
    %874 = vperm.xlu0 %873, %v732
    %v875 = vpop.permute.xlu0 %874
    %878 = vset.pattern.permute.xlu0 0
    %879 = vperm.xlu0 %878, %v733
    %v880 = vpop.permute.xlu0 %879
    %883 = vset.pattern.permute.xlu0 0
    %884 = vperm.xlu0 %883, %v734
    %v885 = vpop.permute.xlu0 %884
    %888 = vset.pattern.permute.xlu0 0
    %889 = vperm.xlu0 %888, %v735
    %v890 = vpop.permute.xlu0 %889
    %893 = vset.pattern.permute.xlu0 0
    %894 = vperm.xlu0 %893, %v736
    %v895 = vpop.permute.xlu0 %894
    %897 = vmatprep.subr.mxu0 0.0
    %898 = vmatpush1.msra.mxu0 %v609
    %899 = vmatprep.subr.mxu0 0.0
    %900 = vmatpush1.msra.mxu0 %v610
    %901 = vmatprep.subr.mxu0 0.0
    %902 = vmatpush1.msra.mxu0 %v611
    %903 = vmatprep.subr.mxu0 0.0
    %904 = vmatpush1.msra.mxu0 %v612
    %905 = vmatprep.subr.mxu0 0.0
    %906 = vmatpush1.msra.mxu0 %v613
    %907 = vmatprep.subr.mxu0 0.0
    %908 = vmatpush1.msra.mxu0 %v614
    %909 = vmatprep.subr.mxu0 0.0
    %910 = vmatpush1.msra.mxu0 %v615
    %911 = vmatprep.subr.mxu0 0.0
    %912 = vmatpush1.msra.mxu0 %v616
    %913 = vmatprep.subr.mxu0 0.0
    %914 = vmatpush1.msra.mxu0 %v617
    %915 = vmatprep.subr.mxu0 0.0
    %916 = vmatpush1.msra.mxu0 %v618
    %917 = vmatprep.subr.mxu0 0.0
    %918 = vmatpush1.msra.mxu0 %v619
    %919 = vmatprep.subr.mxu0 0.0
    %920 = vmatpush1.msra.mxu0 %v620
    %921 = vmatprep.subr.mxu0 0.0
    %922 = vmatpush1.msra.mxu0 %v621
    %923 = vmatprep.subr.mxu0 0.0
    %924 = vmatpush1.msra.mxu0 %v622
    %925 = vmatprep.subr.mxu0 0.0
    %926 = vmatpush1.msra.mxu0 %v623
    %927 = vmatprep.subr.mxu0 0.0
    %928 = vmatpush1.msra.mxu0 %v624
    %929 = vmatprep.subr.mxu0 0.0
    %930 = vmatpush1.msra.mxu0 %v625
    %931 = vmatprep.subr.mxu0 0.0
    %932 = vmatpush1.msra.mxu0 %v626
    %933 = vmatprep.subr.mxu0 0.0
    %934 = vmatpush1.msra.mxu0 %v627
    %935 = vmatprep.subr.mxu0 0.0
    %936 = vmatpush1.msra.mxu0 %v628
    %937 = vmatprep.subr.mxu0 0.0
    %938 = vmatpush1.msra.mxu0 %v629
    %939 = vmatprep.subr.mxu0 0.0
    %940 = vmatpush1.msra.mxu0 %v630
    %941 = vmatprep.subr.mxu0 0.0
    %942 = vmatpush1.msra.mxu0 %v631
    %943 = vmatprep.subr.mxu0 0.0
    %944 = vmatpush1.msra.mxu0 %v632
    %945 = vmatprep.subr.mxu0 0.0
    %946 = vmatpush1.msra.mxu0 %v633
    %947 = vmatprep.subr.mxu0 0.0
    %948 = vmatpush1.msra.mxu0 %v634
    %949 = vmatprep.subr.mxu0 0.0
    %950 = vmatpush1.msra.mxu0 %v635
    %951 = vmatprep.subr.mxu0 0.0
    %952 = vmatpush1.msra.mxu0 %v636
    %953 = vmatprep.subr.mxu0 0.0
    %954 = vmatpush1.msra.mxu0 %v637
    %955 = vmatprep.subr.mxu0 0.0
    %956 = vmatpush1.msra.mxu0 %v638
    %957 = vmatprep.subr.mxu0 0.0
    %958 = vmatpush1.msra.mxu0 %v639
    %959 = vmatprep.subr.mxu0 0.0
    %960 = vmatpush1.msra.mxu0 %v640
    %961 = vmatprep.mubr.f32.mxu0 %v642
    %962 = vmatmul.mubr.f32.gmra.mrb[0].mxu0 %v641
    %v963 = vpop.f32.mrb[0].mxu0
    %v964 = vadd.f32 %v740, %v963
    %v965 = vpop.f32.mrb[0].mxu0
    %966 = vmatprep.mubr.f32.mxu0 %v644
    %967 = vmatmul.mubr.f32.gmra.mrb[0].mxu0 %v643
    %v968 = vpop.f32.mrb[0].mxu0
    %v969 = vadd.f32 %v745, %v968
    %v970 = vpop.f32.mrb[0].mxu0
    %971 = vmatprep.mubr.f32.mxu0 %v646
    %972 = vmatmul.mubr.f32.gmra.mrb[0].mxu0 %v645
    %v973 = vpop.f32.mrb[0].mxu0
    %v974 = vadd.f32 %v750, %v973
    %v975 = vpop.f32.mrb[0].mxu0
    %976 = vmatprep.mubr.f32.mxu0 %v648
    %977 = vmatmul.mubr.f32.gmra.mrb[0].mxu0 %v647
    %v978 = vpop.f32.mrb[0].mxu0
    %v979 = vadd.f32 %v755, %v978
    %v980 = vpop.f32.mrb[0].mxu0
    %981 = vmatprep.mubr.f32.mxu0 %v650
    %982 = vmatmul.mubr.f32.gmra.mrb[0].mxu0 %v649
    %v983 = vpop.f32.mrb[0].mxu0
    %v984 = vadd.f32 %v760, %v983
    %v985 = vpop.f32.mrb[0].mxu0
    %986 = vmatprep.mubr.f32.mxu0 %v652
    %987 = vmatmul.mubr.f32.gmra.mrb[0].mxu0 %v651
    %v988 = vpop.f32.mrb[0].mxu0
    %v989 = vadd.f32 %v765, %v988
    %v990 = vpop.f32.mrb[0].mxu0
    %991 = vmatprep.mubr.f32.mxu0 %v654
    %992 = vmatmul.mubr.f32.gmra.mrb[0].mxu0 %v653
    %v993 = vpop.f32.mrb[0].mxu0
    %v994 = vadd.f32 %v770, %v993
    %v995 = vpop.f32.mrb[0].mxu0
    %996 = vmatprep.mubr.f32.mxu0 %v656
    %997 = vmatmul.mubr.f32.gmra.mrb[0].mxu0 %v655
    %v998 = vpop.f32.mrb[0].mxu0
    %v999 = vadd.f32 %v775, %v998
    %v1000 = vpop.f32.mrb[0].mxu0
    %1001 = vmatprep.mubr.f32.mxu0 %v658
    %1002 = vmatmul.mubr.f32.gmra.mrb[0].mxu0 %v657
    %v1003 = vpop.f32.mrb[0].mxu0
    %v1004 = vadd.f32 %v780, %v1003
    %v1005 = vpop.f32.mrb[0].mxu0
    %1006 = vmatprep.mubr.f32.mxu0 %v660
    %1007 = vmatmul.mubr.f32.gmra.mrb[0].mxu0 %v659
    %v1008 = vpop.f32.mrb[0].mxu0
    %v1009 = vadd.f32 %v785, %v1008
    %v1010 = vpop.f32.mrb[0].mxu0
    %1011 = vmatprep.mubr.f32.mxu0 %v662
    %1012 = vmatmul.mubr.f32.gmra.mrb[0].mxu0 %v661
    %v1013 = vpop.f32.mrb[0].mxu0
    %v1014 = vadd.f32 %v790, %v1013
    %v1015 = vpop.f32.mrb[0].mxu0
    %1016 = vmatprep.mubr.f32.mxu0 %v664
    %1017 = vmatmul.mubr.f32.gmra.mrb[0].mxu0 %v663
    %v1018 = vpop.f32.mrb[0].mxu0
    %v1019 = vadd.f32 %v795, %v1018
    %v1020 = vpop.f32.mrb[0].mxu0
    %1021 = vmatprep.mubr.f32.mxu0 %v666
    %1022 = vmatmul.mubr.f32.gmra.mrb[0].mxu0 %v665
    %v1023 = vpop.f32.mrb[0].mxu0
    %v1024 = vadd.f32 %v800, %v1023
    %v1025 = vpop.f32.mrb[0].mxu0
    %1026 = vmatprep.mubr.f32.mxu0 %v668
    %1027 = vmatmul.mubr.f32.gmra.mrb[0].mxu0 %v667
    %v1028 = vpop.f32.mrb[0].mxu0
    %v1029 = vadd.f32 %v805, %v1028
    %v1030 = vpop.f32.mrb[0].mxu0
    %1031 = vmatprep.mubr.f32.mxu0 %v670
    %1032 = vmatmul.mubr.f32.gmra.mrb[0].mxu0 %v669
    %v1033 = vpop.f32.mrb[0].mxu0
    %v1034 = vadd.f32 %v810, %v1033
    %v1035 = vpop.f32.mrb[0].mxu0
    %1036 = vmatprep.mubr.f32.mxu0 %v672
    %1037 = vmatmul.mubr.f32.gmra.mrb[0].mxu0 %v671
    %v1038 = vpop.f32.mrb[0].mxu0
    %v1039 = vadd.f32 %v815, %v1038
    %v1040 = vpop.f32.mrb[0].mxu0
    %1041 = vmatprep.mubr.f32.mxu0 %v674
    %1042 = vmatmul.mubr.f32.gmra.mrb[0].mxu0 %v673
    %v1043 = vpop.f32.mrb[0].mxu0
    %v1044 = vadd.f32 %v820, %v1043
    %v1045 = vpop.f32.mrb[0].mxu0
    %1046 = vmatprep.mubr.f32.mxu0 %v676
    %1047 = vmatmul.mubr.f32.gmra.mrb[0].mxu0 %v675
    %v1048 = vpop.f32.mrb[0].mxu0
    %v1049 = vadd.f32 %v825, %v1048
    %v1050 = vpop.f32.mrb[0].mxu0
    %1051 = vmatprep.mubr.f32.mxu0 %v678
    %1052 = vmatmul.mubr.f32.gmra.mrb[0].mxu0 %v677
    %v1053 = vpop.f32.mrb[0].mxu0
    %v1054 = vadd.f32 %v830, %v1053
    %v1055 = vpop.f32.mrb[0].mxu0
    %1056 = vmatprep.mubr.f32.mxu0 %v680
    %1057 = vmatmul.mubr.f32.gmra.mrb[0].mxu0 %v679
    %v1058 = vpop.f32.mrb[0].mxu0
    %v1059 = vadd.f32 %v835, %v1058
    %v1060 = vpop.f32.mrb[0].mxu0
    %1061 = vmatprep.mubr.f32.mxu0 %v682
    %1062 = vmatmul.mubr.f32.gmra.mrb[0].mxu0 %v681
    %v1063 = vpop.f32.mrb[0].mxu0
    %v1064 = vadd.f32 %v840, %v1063
    %v1065 = vpop.f32.mrb[0].mxu0
    %1066 = vmatprep.mubr.f32.mxu0 %v684
    %1067 = vmatmul.mubr.f32.gmra.mrb[0].mxu0 %v683
    %v1068 = vpop.f32.mrb[0].mxu0
    %v1069 = vadd.f32 %v845, %v1068
    %v1070 = vpop.f32.mrb[0].mxu0
    %1071 = vmatprep.mubr.f32.mxu0 %v686
    %1072 = vmatmul.mubr.f32.gmra.mrb[0].mxu0 %v685
    %v1073 = vpop.f32.mrb[0].mxu0
    %v1074 = vadd.f32 %v850, %v1073
    %v1075 = vpop.f32.mrb[0].mxu0
    %1076 = vmatprep.mubr.f32.mxu0 %v688
    %1077 = vmatmul.mubr.f32.gmra.mrb[0].mxu0 %v687
    %v1078 = vpop.f32.mrb[0].mxu0
    %v1079 = vadd.f32 %v855, %v1078
    %v1080 = vpop.f32.mrb[0].mxu0
    %1081 = vmatprep.mubr.f32.mxu0 %v690
    %1082 = vmatmul.mubr.f32.gmra.mrb[0].mxu0 %v689
    %v1083 = vpop.f32.mrb[0].mxu0
    %v1084 = vadd.f32 %v860, %v1083
    %v1085 = vpop.f32.mrb[0].mxu0
    %1086 = vmatprep.mubr.f32.mxu0 %v692
    %1087 = vmatmul.mubr.f32.gmra.mrb[0].mxu0 %v691
    %v1088 = vpop.f32.mrb[0].mxu0
    %v1089 = vadd.f32 %v865, %v1088
    %v1090 = vpop.f32.mrb[0].mxu0
    %1091 = vmatprep.mubr.f32.mxu0 %v694
    %1092 = vmatmul.mubr.f32.gmra.mrb[0].mxu0 %v693
    %v1093 = vpop.f32.mrb[0].mxu0
    %v1094 = vadd.f32 %v870, %v1093
    %v1095 = vpop.f32.mrb[0].mxu0
    %1096 = vmatprep.mubr.f32.mxu0 %v696
    %1097 = vmatmul.mubr.f32.gmra.mrb[0].mxu0 %v695
    %v1098 = vpop.f32.mrb[0].mxu0
    %v1099 = vadd.f32 %v875, %v1098
    %v1100 = vpop.f32.mrb[0].mxu0
    %1101 = vmatprep.mubr.f32.mxu0 %v698
    %1102 = vmatmul.mubr.f32.gmra.mrb[0].mxu0 %v697
    %v1103 = vpop.f32.mrb[0].mxu0
    %v1104 = vadd.f32 %v880, %v1103
    %v1105 = vpop.f32.mrb[0].mxu0
    %1106 = vmatprep.mubr.f32.mxu0 %v700
    %1107 = vmatmul.mubr.f32.gmra.mrb[0].mxu0 %v699
    %v1108 = vpop.f32.mrb[0].mxu0
    %v1109 = vadd.f32 %v885, %v1108
    %v1110 = vpop.f32.mrb[0].mxu0
    %1111 = vmatprep.mubr.f32.mxu0 %v702
    %1112 = vmatmul.mubr.f32.gmra.mrb[0].mxu0 %v701
    %v1113 = vpop.f32.mrb[0].mxu0
    %v1114 = vadd.f32 %v890, %v1113
    %v1115 = vpop.f32.mrb[0].mxu0
    %1116 = vmatprep.mubr.f32.mxu0 %v704
    %1117 = vmatmul.mubr.f32.gmra.mrb[0].mxu0 %v703
    %v1118 = vpop.f32.mrb[0].mxu0
    %v1119 = vadd.f32 %v895, %v1118
    %v1120 = vpop.f32.mrb[0].mxu0
    %1121 = vdwg.mxu0
    %v1122 = vtanh.pop %v964
    %v1123 = vtanh.pop %v969
    %v1124 = vtanh.pop %v974
    %v1125 = vtanh.pop %v979
    %v1126 = vtanh.pop %v984
    %v1127 = vtanh.pop %v989
    %v1128 = vtanh.pop %v994
    %v1129 = vtanh.pop %v999
    %v1130 = vtanh.pop %v1004
    %v1131 = vtanh.pop %v1009
    %v1132 = vtanh.pop %v1014
    %v1133 = vtanh.pop %v1019
    %v1134 = vtanh.pop %v1024
    %v1135 = vtanh.pop %v1029
    %v1136 = vtanh.pop %v1034
    %v1137 = vtanh.pop %v1039
    %v1138 = vtanh.pop %v1044
    %v1139 = vtanh.pop %v1049
    %v1140 = vtanh.pop %v1054
    %v1141 = vtanh.pop %v1059
    %v1142 = vtanh.pop %v1064
    %v1143 = vtanh.pop %v1069
    %v1144 = vtanh.pop %v1074
    %v1145 = vtanh.pop %v1079
    %v1146 = vtanh.pop %v1084
    %v1147 = vtanh.pop %v1089
    %v1148 = vtanh.pop %v1094
    %v1149 = vtanh.pop %v1099
    %v1150 = vtanh.pop %v1104
    %v1151 = vtanh.pop %v1109
    %v1152 = vtanh.pop %v1114
    %v1153 = vtanh.pop %v1119
    %v1154 = vld [vmem:[%s5] sm:$0xff]
    %v1155 = vld [vmem:[%s5 + $0x8] sm:$0xff]
    %v1156 = vld [vmem:[%s5 + $0x10] sm:$0xff]
    %v1157 = vld [vmem:[%s5 + $0x18] sm:$0xff]
    %v1158 = vld [vmem:[%s5 + $0x20] sm:$0xff]
    %v1159 = vld [vmem:[%s5 + $0x28] sm:$0xff]
    %v1160 = vld [vmem:[%s5 + $0x30] sm:$0xff]
    %v1161 = vld [vmem:[%s5 + $0x38] sm:$0xff]
    %v1162 = vld [vmem:[%s5 + $0x40] sm:$0xff]
    %v1163 = vld [vmem:[%s5 + $0x48] sm:$0xff]
    %v1164 = vld [vmem:[%s5 + $0x50] sm:$0xff]
    %v1165 = vld [vmem:[%s5 + $0x58] sm:$0xff]
    %v1166 = vld [vmem:[%s5 + $0x60] sm:$0xff]
    %v1167 = vld [vmem:[%s5 + $0x68] sm:$0xff]
    %v1168 = vld [vmem:[%s5 + $0x70] sm:$0xff]
    %v1169 = vld [vmem:[%s5 + $0x78] sm:$0xff]
    %v1170 = vld [vmem:[%s5 + $0x80] sm:$0xff]
    %v1171 = vld [vmem:[%s5 + $0x88] sm:$0xff]
    %v1172 = vld [vmem:[%s5 + $0x90] sm:$0xff]
    %v1173 = vld [vmem:[%s5 + $0x98] sm:$0xff]
    %v1174 = vld [vmem:[%s5 + $0xa0] sm:$0xff]
    %v1175 = vld [vmem:[%s5 + $0xa8] sm:$0xff]
    %v1176 = vld [vmem:[%s5 + $0xb0] sm:$0xff]
    %v1177 = vld [vmem:[%s5 + $0xb8] sm:$0xff]
    %v1178 = vld [vmem:[%s5 + $0xc0] sm:$0xff]
    %v1179 = vld [vmem:[%s5 + $0xc8] sm:$0xff]
    %v1180 = vld [vmem:[%s5 + $0xd0] sm:$0xff]
    %v1181 = vld [vmem:[%s5 + $0xd8] sm:$0xff]
    %v1182 = vld [vmem:[%s5 + $0xe0] sm:$0xff]
    %v1183 = vld [vmem:[%s5 + $0xe8] sm:$0xff]
    %v1184 = vld [vmem:[%s5 + $0xf0] sm:$0xff]
    %v1185 = vld [vmem:[%s5 + $0xf8] sm:$0xff]
    %v1186 = vld [vmem:[%s5 + $0x100] sm:$0xff]
    %v1187 = vld [vmem:[%s5 + $0x108] sm:$0xff]
    %v1188 = vld [vmem:[%s5 + $0x110] sm:$0xff]
    %v1189 = vld [vmem:[%s5 + $0x118] sm:$0xff]
    %v1190 = vld [vmem:[%s5 + $0x120] sm:$0xff]
    %v1191 = vld [vmem:[%s5 + $0x128] sm:$0xff]
    %v1192 = vld [vmem:[%s5 + $0x130] sm:$0xff]
    %v1193 = vld [vmem:[%s5 + $0x138] sm:$0xff]
    %v1194 = vld [vmem:[%s5 + $0x140] sm:$0xff]
    %v1195 = vld [vmem:[%s5 + $0x148] sm:$0xff]
    %v1196 = vld [vmem:[%s5 + $0x150] sm:$0xff]
    %v1197 = vld [vmem:[%s5 + $0x158] sm:$0xff]
    %v1198 = vld [vmem:[%s5 + $0x160] sm:$0xff]
    %v1199 = vld [vmem:[%s5 + $0x168] sm:$0xff]
    %v1200 = vld [vmem:[%s5 + $0x170] sm:$0xff]
    %v1201 = vld [vmem:[%s5 + $0x178] sm:$0xff]
    %v1202 = vld [vmem:[%s5 + $0x180] sm:$0xff]
    %v1203 = vld [vmem:[%s5 + $0x188] sm:$0xff]
    %v1204 = vld [vmem:[%s5 + $0x190] sm:$0xff]
    %v1205 = vld [vmem:[%s5 + $0x198] sm:$0xff]
    %v1206 = vld [vmem:[%s5 + $0x1a0] sm:$0xff]
    %v1207 = vld [vmem:[%s5 + $0x1a8] sm:$0xff]
    %v1208 = vld [vmem:[%s5 + $0x1b0] sm:$0xff]
    %v1209 = vld [vmem:[%s5 + $0x1b8] sm:$0xff]
    %v1210 = vld [vmem:[%s5 + $0x1c0] sm:$0xff]
    %v1211 = vld [vmem:[%s5 + $0x1c8] sm:$0xff]
    %v1212 = vld [vmem:[%s5 + $0x1d0] sm:$0xff]
    %v1213 = vld [vmem:[%s5 + $0x1d8] sm:$0xff]
    %v1214 = vld [vmem:[%s5 + $0x1e0] sm:$0xff]
    %v1215 = vld [vmem:[%s5 + $0x1e8] sm:$0xff]
    %v1216 = vld [vmem:[%s5 + $0x1f0] sm:$0xff]
    %v1217 = vld [vmem:[%s5 + $0x1f8] sm:$0xff]
    %v1218 = vld [vmem:[%s6] sm:$0xff]
    %v1219 = vld [vmem:[%s6 + $0x8] sm:$0xff]
    %v1220 = vld [vmem:[%s6 + $0x10] sm:$0xff]
    %v1221 = vld [vmem:[%s6 + $0x18] sm:$0xff]
    %v1222 = vld [vmem:[%s6 + $0x20] sm:$0xff]
    %v1223 = vld [vmem:[%s6 + $0x28] sm:$0xff]
    %v1224 = vld [vmem:[%s6 + $0x30] sm:$0xff]
    %v1225 = vld [vmem:[%s6 + $0x38] sm:$0xff]
    %v1226 = vld [vmem:[%s6 + $0x40] sm:$0xff]
    %v1227 = vld [vmem:[%s6 + $0x48] sm:$0xff]
    %v1228 = vld [vmem:[%s6 + $0x50] sm:$0xff]
    %v1229 = vld [vmem:[%s6 + $0x58] sm:$0xff]
    %v1230 = vld [vmem:[%s6 + $0x60] sm:$0xff]
    %v1231 = vld [vmem:[%s6 + $0x68] sm:$0xff]
    %v1232 = vld [vmem:[%s6 + $0x70] sm:$0xff]
    %v1233 = vld [vmem:[%s6 + $0x78] sm:$0xff]
    %v1234 = vld [vmem:[%s6 + $0x80] sm:$0xff]
    %v1235 = vld [vmem:[%s6 + $0x88] sm:$0xff]
    %v1236 = vld [vmem:[%s6 + $0x90] sm:$0xff]
    %v1237 = vld [vmem:[%s6 + $0x98] sm:$0xff]
    %v1238 = vld [vmem:[%s6 + $0xa0] sm:$0xff]
    %v1239 = vld [vmem:[%s6 + $0xa8] sm:$0xff]
    %v1240 = vld [vmem:[%s6 + $0xb0] sm:$0xff]
    %v1241 = vld [vmem:[%s6 + $0xb8] sm:$0xff]
    %v1242 = vld [vmem:[%s6 + $0xc0] sm:$0xff]
    %v1243 = vld [vmem:[%s6 + $0xc8] sm:$0xff]
    %v1244 = vld [vmem:[%s6 + $0xd0] sm:$0xff]
    %v1245 = vld [vmem:[%s6 + $0xd8] sm:$0xff]
    %v1246 = vld [vmem:[%s6 + $0xe0] sm:$0xff]
    %v1247 = vld [vmem:[%s6 + $0xe8] sm:$0xff]
    %v1248 = vld [vmem:[%s6 + $0xf0] sm:$0xff]
    %v1249 = vld [vmem:[%s6 + $0xf8] sm:$0xff]
    %1251 = vset.pattern.permute.xlu0 0
    %1252 = vperm.xlu0 %1251, %v1218
    %v1253 = vpop.permute.xlu0 %1252
    %1256 = vset.pattern.permute.xlu0 0
    %1257 = vperm.xlu0 %1256, %v1219
    %v1258 = vpop.permute.xlu0 %1257
    %1261 = vset.pattern.permute.xlu0 0
    %1262 = vperm.xlu0 %1261, %v1220
    %v1263 = vpop.permute.xlu0 %1262
    %1266 = vset.pattern.permute.xlu0 0
    %1267 = vperm.xlu0 %1266, %v1221
    %v1268 = vpop.permute.xlu0 %1267
    %1271 = vset.pattern.permute.xlu0 0
    %1272 = vperm.xlu0 %1271, %v1222
    %v1273 = vpop.permute.xlu0 %1272
    %1276 = vset.pattern.permute.xlu0 0
    %1277 = vperm.xlu0 %1276, %v1223
    %v1278 = vpop.permute.xlu0 %1277
    %1281 = vset.pattern.permute.xlu0 0
    %1282 = vperm.xlu0 %1281, %v1224
    %v1283 = vpop.permute.xlu0 %1282
    %1286 = vset.pattern.permute.xlu0 0
    %1287 = vperm.xlu0 %1286, %v1225
    %v1288 = vpop.permute.xlu0 %1287
    %1291 = vset.pattern.permute.xlu0 0
    %1292 = vperm.xlu0 %1291, %v1226
    %v1293 = vpop.permute.xlu0 %1292
    %1296 = vset.pattern.permute.xlu0 0
    %1297 = vperm.xlu0 %1296, %v1227
    %v1298 = vpop.permute.xlu0 %1297
    %1301 = vset.pattern.permute.xlu0 0
    %1302 = vperm.xlu0 %1301, %v1228
    %v1303 = vpop.permute.xlu0 %1302
    %1306 = vset.pattern.permute.xlu0 0
    %1307 = vperm.xlu0 %1306, %v1229
    %v1308 = vpop.permute.xlu0 %1307
    %1311 = vset.pattern.permute.xlu0 0
    %1312 = vperm.xlu0 %1311, %v1230
    %v1313 = vpop.permute.xlu0 %1312
    %1316 = vset.pattern.permute.xlu0 0
    %1317 = vperm.xlu0 %1316, %v1231
    %v1318 = vpop.permute.xlu0 %1317
    %1321 = vset.pattern.permute.xlu0 0
    %1322 = vperm.xlu0 %1321, %v1232
    %v1323 = vpop.permute.xlu0 %1322
    %1326 = vset.pattern.permute.xlu0 0
    %1327 = vperm.xlu0 %1326, %v1233
    %v1328 = vpop.permute.xlu0 %1327
    %1331 = vset.pattern.permute.xlu0 0
    %1332 = vperm.xlu0 %1331, %v1234
    %v1333 = vpop.permute.xlu0 %1332
    %1336 = vset.pattern.permute.xlu0 0
    %1337 = vperm.xlu0 %1336, %v1235
    %v1338 = vpop.permute.xlu0 %1337
    %1341 = vset.pattern.permute.xlu0 0
    %1342 = vperm.xlu0 %1341, %v1236
    %v1343 = vpop.permute.xlu0 %1342
    %1346 = vset.pattern.permute.xlu0 0
    %1347 = vperm.xlu0 %1346, %v1237
    %v1348 = vpop.permute.xlu0 %1347
    %1351 = vset.pattern.permute.xlu0 0
    %1352 = vperm.xlu0 %1351, %v1238
    %v1353 = vpop.permute.xlu0 %1352
    %1356 = vset.pattern.permute.xlu0 0
    %1357 = vperm.xlu0 %1356, %v1239
    %v1358 = vpop.permute.xlu0 %1357
    %1361 = vset.pattern.permute.xlu0 0
    %1362 = vperm.xlu0 %1361, %v1240
    %v1363 = vpop.permute.xlu0 %1362
    %1366 = vset.pattern.permute.xlu0 0
    %1367 = vperm.xlu0 %1366, %v1241
    %v1368 = vpop.permute.xlu0 %1367
    %1371 = vset.pattern.permute.xlu0 0
    %1372 = vperm.xlu0 %1371, %v1242
    %v1373 = vpop.permute.xlu0 %1372
    %1376 = vset.pattern.permute.xlu0 0
    %1377 = vperm.xlu0 %1376, %v1243
    %v1378 = vpop.permute.xlu0 %1377
    %1381 = vset.pattern.permute.xlu0 0
    %1382 = vperm.xlu0 %1381, %v1244
    %v1383 = vpop.permute.xlu0 %1382
    %1386 = vset.pattern.permute.xlu0 0
    %1387 = vperm.xlu0 %1386, %v1245
    %v1388 = vpop.permute.xlu0 %1387
    %1391 = vset.pattern.permute.xlu0 0
    %1392 = vperm.xlu0 %1391, %v1246
    %v1393 = vpop.permute.xlu0 %1392
    %1396 = vset.pattern.permute.xlu0 0
    %1397 = vperm.xlu0 %1396, %v1247
    %v1398 = vpop.permute.xlu0 %1397
    %1401 = vset.pattern.permute.xlu0 0
    %1402 = vperm.xlu0 %1401, %v1248
    %v1403 = vpop.permute.xlu0 %1402
    %1406 = vset.pattern.permute.xlu0 0
    %1407 = vperm.xlu0 %1406, %v1249
    %v1408 = vpop.permute.xlu0 %1407
    %1410 = vmatprep.subr.mxu0 0.0
    %1411 = vmatpush1.msra.mxu0 %v1122
    %1412 = vmatprep.subr.mxu0 0.0
    %1413 = vmatpush1.msra.mxu0 %v1123
    %1414 = vmatprep.subr.mxu0 0.0
    %1415 = vmatpush1.msra.mxu0 %v1124
    %1416 = vmatprep.subr.mxu0 0.0
    %1417 = vmatpush1.msra.mxu0 %v1125
    %1418 = vmatprep.subr.mxu0 0.0
    %1419 = vmatpush1.msra.mxu0 %v1126
    %1420 = vmatprep.subr.mxu0 0.0
    %1421 = vmatpush1.msra.mxu0 %v1127
    %1422 = vmatprep.subr.mxu0 0.0
    %1423 = vmatpush1.msra.mxu0 %v1128
    %1424 = vmatprep.subr.mxu0 0.0
    %1425 = vmatpush1.msra.mxu0 %v1129
    %1426 = vmatprep.subr.mxu0 0.0
    %1427 = vmatpush1.msra.mxu0 %v1130
    %1428 = vmatprep.subr.mxu0 0.0
    %1429 = vmatpush1.msra.mxu0 %v1131
    %1430 = vmatprep.subr.mxu0 0.0
    %1431 = vmatpush1.msra.mxu0 %v1132
    %1432 = vmatprep.subr.mxu0 0.0
    %1433 = vmatpush1.msra.mxu0 %v1133
    %1434 = vmatprep.subr.mxu0 0.0
    %1435 = vmatpush1.msra.mxu0 %v1134
    %1436 = vmatprep.subr.mxu0 0.0
    %1437 = vmatpush1.msra.mxu0 %v1135
    %1438 = vmatprep.subr.mxu0 0.0
    %1439 = vmatpush1.msra.mxu0 %v1136
    %1440 = vmatprep.subr.mxu0 0.0
    %1441 = vmatpush1.msra.mxu0 %v1137
    %1442 = vmatprep.subr.mxu0 0.0
    %1443 = vmatpush1.msra.mxu0 %v1138
    %1444 = vmatprep.subr.mxu0 0.0
    %1445 = vmatpush1.msra.mxu0 %v1139
    %1446 = vmatprep.subr.mxu0 0.0
    %1447 = vmatpush1.msra.mxu0 %v1140
    %1448 = vmatprep.subr.mxu0 0.0
    %1449 = vmatpush1.msra.mxu0 %v1141
    %1450 = vmatprep.subr.mxu0 0.0
    %1451 = vmatpush1.msra.mxu0 %v1142
    %1452 = vmatprep.subr.mxu0 0.0
    %1453 = vmatpush1.msra.mxu0 %v1143
    %1454 = vmatprep.subr.mxu0 0.0
    %1455 = vmatpush1.msra.mxu0 %v1144
    %1456 = vmatprep.subr.mxu0 0.0
    %1457 = vmatpush1.msra.mxu0 %v1145
    %1458 = vmatprep.subr.mxu0 0.0
    %1459 = vmatpush1.msra.mxu0 %v1146
    %1460 = vmatprep.subr.mxu0 0.0
    %1461 = vmatpush1.msra.mxu0 %v1147
    %1462 = vmatprep.subr.mxu0 0.0
    %1463 = vmatpush1.msra.mxu0 %v1148
    %1464 = vmatprep.subr.mxu0 0.0
    %1465 = vmatpush1.msra.mxu0 %v1149
    %1466 = vmatprep.subr.mxu0 0.0
    %1467 = vmatpush1.msra.mxu0 %v1150
    %1468 = vmatprep.subr.mxu0 0.0
    %1469 = vmatpush1.msra.mxu0 %v1151
    %1470 = vmatprep.subr.mxu0 0.0
    %1471 = vmatpush1.msra.mxu0 %v1152
    %1472 = vmatprep.subr.mxu0 0.0
    %1473 = vmatpush1.msra.mxu0 %v1153
    %1474 = vmatprep.mubr.f32.mxu0 %v1155
    %1475 = vmatmul.mubr.f32.gmra.mrb[0].mxu0 %v1154
    %v1476 = vpop.f32.mrb[0].mxu0
    %v1477 = vadd.f32 %v1253, %v1476
    %v1478 = vpop.f32.mrb[0].mxu0
    %1479 = vmatprep.mubr.f32.mxu0 %v1157
    %1480 = vmatmul.mubr.f32.gmra.mrb[0].mxu0 %v1156
    %v1481 = vpop.f32.mrb[0].mxu0
    %v1482 = vadd.f32 %v1258, %v1481
    %v1483 = vpop.f32.mrb[0].mxu0
    %1484 = vmatprep.mubr.f32.mxu0 %v1159
    %1485 = vmatmul.mubr.f32.gmra.mrb[0].mxu0 %v1158
    %v1486 = vpop.f32.mrb[0].mxu0
    %v1487 = vadd.f32 %v1263, %v1486
    %v1488 = vpop.f32.mrb[0].mxu0
    %1489 = vmatprep.mubr.f32.mxu0 %v1161
    %1490 = vmatmul.mubr.f32.gmra.mrb[0].mxu0 %v1160
    %v1491 = vpop.f32.mrb[0].mxu0
    %v1492 = vadd.f32 %v1268, %v1491
    %v1493 = vpop.f32.mrb[0].mxu0
    %1494 = vmatprep.mubr.f32.mxu0 %v1163
    %1495 = vmatmul.mubr.f32.gmra.mrb[0].mxu0 %v1162
    %v1496 = vpop.f32.mrb[0].mxu0
    %v1497 = vadd.f32 %v1273, %v1496
    %v1498 = vpop.f32.mrb[0].mxu0
    %1499 = vmatprep.mubr.f32.mxu0 %v1165
    %1500 = vmatmul.mubr.f32.gmra.mrb[0].mxu0 %v1164
    %v1501 = vpop.f32.mrb[0].mxu0
    %v1502 = vadd.f32 %v1278, %v1501
    %v1503 = vpop.f32.mrb[0].mxu0
    %1504 = vmatprep.mubr.f32.mxu0 %v1167
    %1505 = vmatmul.mubr.f32.gmra.mrb[0].mxu0 %v1166
    %v1506 = vpop.f32.mrb[0].mxu0
    %v1507 = vadd.f32 %v1283, %v1506
    %v1508 = vpop.f32.mrb[0].mxu0
    %1509 = vmatprep.mubr.f32.mxu0 %v1169
    %1510 = vmatmul.mubr.f32.gmra.mrb[0].mxu0 %v1168
    %v1511 = vpop.f32.mrb[0].mxu0
    %v1512 = vadd.f32 %v1288, %v1511
    %v1513 = vpop.f32.mrb[0].mxu0
    %1514 = vmatprep.mubr.f32.mxu0 %v1171
    %1515 = vmatmul.mubr.f32.gmra.mrb[0].mxu0 %v1170
    %v1516 = vpop.f32.mrb[0].mxu0
    %v1517 = vadd.f32 %v1293, %v1516
    %v1518 = vpop.f32.mrb[0].mxu0
    %1519 = vmatprep.mubr.f32.mxu0 %v1173
    %1520 = vmatmul.mubr.f32.gmra.mrb[0].mxu0 %v1172
    %v1521 = vpop.f32.mrb[0].mxu0
    %v1522 = vadd.f32 %v1298, %v1521
    %v1523 = vpop.f32.mrb[0].mxu0
    %1524 = vmatprep.mubr.f32.mxu0 %v1175
    %1525 = vmatmul.mubr.f32.gmra.mrb[0].mxu0 %v1174
    %v1526 = vpop.f32.mrb[0].mxu0
    %v1527 = vadd.f32 %v1303, %v1526
    %v1528 = vpop.f32.mrb[0].mxu0
    %1529 = vmatprep.mubr.f32.mxu0 %v1177
    %1530 = vmatmul.mubr.f32.gmra.mrb[0].mxu0 %v1176
    %v1531 = vpop.f32.mrb[0].mxu0
    %v1532 = vadd.f32 %v1308, %v1531
    %v1533 = vpop.f32.mrb[0].mxu0
    %1534 = vmatprep.mubr.f32.mxu0 %v1179
    %1535 = vmatmul.mubr.f32.gmra.mrb[0].mxu0 %v1178
    %v1536 = vpop.f32.mrb[0].mxu0
    %v1537 = vadd.f32 %v1313, %v1536
    %v1538 = vpop.f32.mrb[0].mxu0
    %1539 = vmatprep.mubr.f32.mxu0 %v1181
    %1540 = vmatmul.mubr.f32.gmra.mrb[0].mxu0 %v1180
    %v1541 = vpop.f32.mrb[0].mxu0
    %v1542 = vadd.f32 %v1318, %v1541
    %v1543 = vpop.f32.mrb[0].mxu0
    %1544 = vmatprep.mubr.f32.mxu0 %v1183
    %1545 = vmatmul.mubr.f32.gmra.mrb[0].mxu0 %v1182
    %v1546 = vpop.f32.mrb[0].mxu0
    %v1547 = vadd.f32 %v1323, %v1546
    %v1548 = vpop.f32.mrb[0].mxu0
    %1549 = vmatprep.mubr.f32.mxu0 %v1185
    %1550 = vmatmul.mubr.f32.gmra.mrb[0].mxu0 %v1184
    %v1551 = vpop.f32.mrb[0].mxu0
    %v1552 = vadd.f32 %v1328, %v1551
    %v1553 = vpop.f32.mrb[0].mxu0
    %1554 = vmatprep.mubr.f32.mxu0 %v1187
    %1555 = vmatmul.mubr.f32.gmra.mrb[0].mxu0 %v1186
    %v1556 = vpop.f32.mrb[0].mxu0
    %v1557 = vadd.f32 %v1333, %v1556
    %v1558 = vpop.f32.mrb[0].mxu0
    %1559 = vmatprep.mubr.f32.mxu0 %v1189
    %1560 = vmatmul.mubr.f32.gmra.mrb[0].mxu0 %v1188
    %v1561 = vpop.f32.mrb[0].mxu0
    %v1562 = vadd.f32 %v1338, %v1561
    %v1563 = vpop.f32.mrb[0].mxu0
    %1564 = vmatprep.mubr.f32.mxu0 %v1191
    %1565 = vmatmul.mubr.f32.gmra.mrb[0].mxu0 %v1190
    %v1566 = vpop.f32.mrb[0].mxu0
    %v1567 = vadd.f32 %v1343, %v1566
    %v1568 = vpop.f32.mrb[0].mxu0
    %1569 = vmatprep.mubr.f32.mxu0 %v1193
    %1570 = vmatmul.mubr.f32.gmra.mrb[0].mxu0 %v1192
    %v1571 = vpop.f32.mrb[0].mxu0
    %v1572 = vadd.f32 %v1348, %v1571
    %v1573 = vpop.f32.mrb[0].mxu0
    %1574 = vmatprep.mubr.f32.mxu0 %v1195
    %1575 = vmatmul.mubr.f32.gmra.mrb[0].mxu0 %v1194
    %v1576 = vpop.f32.mrb[0].mxu0
    %v1577 = vadd.f32 %v1353, %v1576
    %v1578 = vpop.f32.mrb[0].mxu0
    %1579 = vmatprep.mubr.f32.mxu0 %v1197
    %1580 = vmatmul.mubr.f32.gmra.mrb[0].mxu0 %v1196
    %v1581 = vpop.f32.mrb[0].mxu0
    %v1582 = vadd.f32 %v1358, %v1581
    %v1583 = vpop.f32.mrb[0].mxu0
    %1584 = vmatprep.mubr.f32.mxu0 %v1199
    %1585 = vmatmul.mubr.f32.gmra.mrb[0].mxu0 %v1198
    %v1586 = vpop.f32.mrb[0].mxu0
    %v1587 = vadd.f32 %v1363, %v1586
    %v1588 = vpop.f32.mrb[0].mxu0
    %1589 = vmatprep.mubr.f32.mxu0 %v1201
    %1590 = vmatmul.mubr.f32.gmra.mrb[0].mxu0 %v1200
    %v1591 = vpop.f32.mrb[0].mxu0
    %v1592 = vadd.f32 %v1368, %v1591
    %v1593 = vpop.f32.mrb[0].mxu0
    %1594 = vmatprep.mubr.f32.mxu0 %v1203
    %1595 = vmatmul.mubr.f32.gmra.mrb[0].mxu0 %v1202
    %v1596 = vpop.f32.mrb[0].mxu0
    %v1597 = vadd.f32 %v1373, %v1596
    %v1598 = vpop.f32.mrb[0].mxu0
    %1599 = vmatprep.mubr.f32.mxu0 %v1205
    %1600 = vmatmul.mubr.f32.gmra.mrb[0].mxu0 %v1204
    %v1601 = vpop.f32.mrb[0].mxu0
    %v1602 = vadd.f32 %v1378, %v1601
    %v1603 = vpop.f32.mrb[0].mxu0
    %1604 = vmatprep.mubr.f32.mxu0 %v1207
    %1605 = vmatmul.mubr.f32.gmra.mrb[0].mxu0 %v1206
    %v1606 = vpop.f32.mrb[0].mxu0
    %v1607 = vadd.f32 %v1383, %v1606
    %v1608 = vpop.f32.mrb[0].mxu0
    %1609 = vmatprep.mubr.f32.mxu0 %v1209
    %1610 = vmatmul.mubr.f32.gmra.mrb[0].mxu0 %v1208
    %v1611 = vpop.f32.mrb[0].mxu0
    %v1612 = vadd.f32 %v1388, %v1611
    %v1613 = vpop.f32.mrb[0].mxu0
    %1614 = vmatprep.mubr.f32.mxu0 %v1211
    %1615 = vmatmul.mubr.f32.gmra.mrb[0].mxu0 %v1210
    %v1616 = vpop.f32.mrb[0].mxu0
    %v1617 = vadd.f32 %v1393, %v1616
    %v1618 = vpop.f32.mrb[0].mxu0
    %1619 = vmatprep.mubr.f32.mxu0 %v1213
    %1620 = vmatmul.mubr.f32.gmra.mrb[0].mxu0 %v1212
    %v1621 = vpop.f32.mrb[0].mxu0
    %v1622 = vadd.f32 %v1398, %v1621
    %v1623 = vpop.f32.mrb[0].mxu0
    %1624 = vmatprep.mubr.f32.mxu0 %v1215
    %1625 = vmatmul.mubr.f32.gmra.mrb[0].mxu0 %v1214
    %v1626 = vpop.f32.mrb[0].mxu0
    %v1627 = vadd.f32 %v1403, %v1626
    %v1628 = vpop.f32.mrb[0].mxu0
    %1629 = vmatprep.mubr.f32.mxu0 %v1217
    %1630 = vmatmul.mubr.f32.gmra.mrb[0].mxu0 %v1216
    %v1631 = vpop.f32.mrb[0].mxu0
    %v1632 = vadd.f32 %v1408, %v1631
    %v1633 = vpop.f32.mrb[0].mxu0
    %1634 = vdwg.mxu0
    %v1635 = vtanh.pop %v1477
    %v1636 = vtanh.pop %v1482
    %v1637 = vtanh.pop %v1487
    %v1638 = vtanh.pop %v1492
    %v1639 = vtanh.pop %v1497
    %v1640 = vtanh.pop %v1502
    %v1641 = vtanh.pop %v1507
    %v1642 = vtanh.pop %v1512
    %v1643 = vtanh.pop %v1517
    %v1644 = vtanh.pop %v1522
    %v1645 = vtanh.pop %v1527
    %v1646 = vtanh.pop %v1532
    %v1647 = vtanh.pop %v1537
    %v1648 = vtanh.pop %v1542
    %v1649 = vtanh.pop %v1547
    %v1650 = vtanh.pop %v1552
    %v1651 = vtanh.pop %v1557
    %v1652 = vtanh.pop %v1562
    %v1653 = vtanh.pop %v1567
    %v1654 = vtanh.pop %v1572
    %v1655 = vtanh.pop %v1577
    %v1656 = vtanh.pop %v1582
    %v1657 = vtanh.pop %v1587
    %v1658 = vtanh.pop %v1592
    %v1659 = vtanh.pop %v1597
    %v1660 = vtanh.pop %v1602
    %v1661 = vtanh.pop %v1607
    %v1662 = vtanh.pop %v1612
    %v1663 = vtanh.pop %v1617
    %v1664 = vtanh.pop %v1622
    %v1665 = vtanh.pop %v1627
    %v1666 = vtanh.pop %v1632
    %v1667 = vld [vmem:[%s7] sm:$0xff]
    %v1668 = vld [vmem:[%s7 + $0x8] sm:$0xff]
    %v1669 = vld [vmem:[%s7 + $0x10] sm:$0xff]
    %v1670 = vld [vmem:[%s7 + $0x18] sm:$0xff]
    %v1671 = vld [vmem:[%s7 + $0x20] sm:$0xff]
    %v1672 = vld [vmem:[%s7 + $0x28] sm:$0xff]
    %v1673 = vld [vmem:[%s7 + $0x30] sm:$0xff]
    %v1674 = vld [vmem:[%s7 + $0x38] sm:$0xff]
    %v1675 = vld [vmem:[%s7 + $0x40] sm:$0xff]
    %v1676 = vld [vmem:[%s7 + $0x48] sm:$0xff]
    %v1677 = vld [vmem:[%s7 + $0x50] sm:$0xff]
    %v1678 = vld [vmem:[%s7 + $0x58] sm:$0xff]
    %v1679 = vld [vmem:[%s7 + $0x60] sm:$0xff]
    %v1680 = vld [vmem:[%s7 + $0x68] sm:$0xff]
    %v1681 = vld [vmem:[%s7 + $0x70] sm:$0xff]
    %v1682 = vld [vmem:[%s7 + $0x78] sm:$0xff]
    %v1683 = vld [vmem:[%s7 + $0x80] sm:$0xff]
    %v1684 = vld [vmem:[%s7 + $0x88] sm:$0xff]
    %v1685 = vld [vmem:[%s7 + $0x90] sm:$0xff]
    %v1686 = vld [vmem:[%s7 + $0x98] sm:$0xff]
    %v1687 = vld [vmem:[%s7 + $0xa0] sm:$0xff]
    %v1688 = vld [vmem:[%s7 + $0xa8] sm:$0xff]
    %v1689 = vld [vmem:[%s7 + $0xb0] sm:$0xff]
    %v1690 = vld [vmem:[%s7 + $0xb8] sm:$0xff]
    %v1691 = vld [vmem:[%s7 + $0xc0] sm:$0xff]
    %v1692 = vld [vmem:[%s7 + $0xc8] sm:$0xff]
    %v1693 = vld [vmem:[%s7 + $0xd0] sm:$0xff]
    %v1694 = vld [vmem:[%s7 + $0xd8] sm:$0xff]
    %v1695 = vld [vmem:[%s7 + $0xe0] sm:$0xff]
    %v1696 = vld [vmem:[%s7 + $0xe8] sm:$0xff]
    %v1697 = vld [vmem:[%s7 + $0xf0] sm:$0xff]
    %v1698 = vld [vmem:[%s7 + $0xf8] sm:$0xff]
    %v1699 = vld [vmem:[%s7 + $0x100] sm:$0xff]
    %v1700 = vld [vmem:[%s7 + $0x108] sm:$0xff]
    %v1701 = vld [vmem:[%s7 + $0x110] sm:$0xff]
    %v1702 = vld [vmem:[%s7 + $0x118] sm:$0xff]
    %v1703 = vld [vmem:[%s7 + $0x120] sm:$0xff]
    %v1704 = vld [vmem:[%s7 + $0x128] sm:$0xff]
    %v1705 = vld [vmem:[%s7 + $0x130] sm:$0xff]
    %v1706 = vld [vmem:[%s7 + $0x138] sm:$0xff]
    %v1707 = vld [vmem:[%s7 + $0x140] sm:$0xff]
    %v1708 = vld [vmem:[%s7 + $0x148] sm:$0xff]
    %v1709 = vld [vmem:[%s7 + $0x150] sm:$0xff]
    %v1710 = vld [vmem:[%s7 + $0x158] sm:$0xff]
    %v1711 = vld [vmem:[%s7 + $0x160] sm:$0xff]
    %v1712 = vld [vmem:[%s7 + $0x168] sm:$0xff]
    %v1713 = vld [vmem:[%s7 + $0x170] sm:$0xff]
    %v1714 = vld [vmem:[%s7 + $0x178] sm:$0xff]
    %v1715 = vld [vmem:[%s7 + $0x180] sm:$0xff]
    %v1716 = vld [vmem:[%s7 + $0x188] sm:$0xff]
    %v1717 = vld [vmem:[%s7 + $0x190] sm:$0xff]
    %v1718 = vld [vmem:[%s7 + $0x198] sm:$0xff]
    %v1719 = vld [vmem:[%s7 + $0x1a0] sm:$0xff]
    %v1720 = vld [vmem:[%s7 + $0x1a8] sm:$0xff]
    %v1721 = vld [vmem:[%s7 + $0x1b0] sm:$0xff]
    %v1722 = vld [vmem:[%s7 + $0x1b8] sm:$0xff]
    %v1723 = vld [vmem:[%s7 + $0x1c0] sm:$0xff]
    %v1724 = vld [vmem:[%s7 + $0x1c8] sm:$0xff]
    %v1725 = vld [vmem:[%s7 + $0x1d0] sm:$0xff]
    %v1726 = vld [vmem:[%s7 + $0x1d8] sm:$0xff]
    %v1727 = vld [vmem:[%s7 + $0x1e0] sm:$0xff]
    %v1728 = vld [vmem:[%s7 + $0x1e8] sm:$0xff]
    %v1729 = vld [vmem:[%s7 + $0x1f0] sm:$0xff]
    %v1730 = vld [vmem:[%s7 + $0x1f8] sm:$0xff]
    %v1731 = vld [vmem:[%s8] sm:$0xff]
    %v1732 = vld [vmem:[%s8 + $0x8] sm:$0xff]
    %v1733 = vld [vmem:[%s8 + $0x10] sm:$0xff]
    %v1734 = vld [vmem:[%s8 + $0x18] sm:$0xff]
    %v1735 = vld [vmem:[%s8 + $0x20] sm:$0xff]
    %v1736 = vld [vmem:[%s8 + $0x28] sm:$0xff]
    %v1737 = vld [vmem:[%s8 + $0x30] sm:$0xff]
    %v1738 = vld [vmem:[%s8 + $0x38] sm:$0xff]
    %v1739 = vld [vmem:[%s8 + $0x40] sm:$0xff]
    %v1740 = vld [vmem:[%s8 + $0x48] sm:$0xff]
    %v1741 = vld [vmem:[%s8 + $0x50] sm:$0xff]
    %v1742 = vld [vmem:[%s8 + $0x58] sm:$0xff]
    %v1743 = vld [vmem:[%s8 + $0x60] sm:$0xff]
    %v1744 = vld [vmem:[%s8 + $0x68] sm:$0xff]
    %v1745 = vld [vmem:[%s8 + $0x70] sm:$0xff]
    %v1746 = vld [vmem:[%s8 + $0x78] sm:$0xff]
    %v1747 = vld [vmem:[%s8 + $0x80] sm:$0xff]
    %v1748 = vld [vmem:[%s8 + $0x88] sm:$0xff]
    %v1749 = vld [vmem:[%s8 + $0x90] sm:$0xff]
    %v1750 = vld [vmem:[%s8 + $0x98] sm:$0xff]
    %v1751 = vld [vmem:[%s8 + $0xa0] sm:$0xff]
    %v1752 = vld [vmem:[%s8 + $0xa8] sm:$0xff]
    %v1753 = vld [vmem:[%s8 + $0xb0] sm:$0xff]
    %v1754 = vld [vmem:[%s8 + $0xb8] sm:$0xff]
    %v1755 = vld [vmem:[%s8 + $0xc0] sm:$0xff]
    %v1756 = vld [vmem:[%s8 + $0xc8] sm:$0xff]
    %v1757 = vld [vmem:[%s8 + $0xd0] sm:$0xff]
    %v1758 = vld [vmem:[%s8 + $0xd8] sm:$0xff]
    %v1759 = vld [vmem:[%s8 + $0xe0] sm:$0xff]
    %v1760 = vld [vmem:[%s8 + $0xe8] sm:$0xff]
    %v1761 = vld [vmem:[%s8 + $0xf0] sm:$0xff]
    %v1762 = vld [vmem:[%s8 + $0xf8] sm:$0xff]
    %1764 = vset.pattern.permute.xlu0 0
    %1765 = vperm.xlu0 %1764, %v1731
    %v1766 = vpop.permute.xlu0 %1765
    %1769 = vset.pattern.permute.xlu0 0
    %1770 = vperm.xlu0 %1769, %v1732
    %v1771 = vpop.permute.xlu0 %1770
    %1774 = vset.pattern.permute.xlu0 0
    %1775 = vperm.xlu0 %1774, %v1733
    %v1776 = vpop.permute.xlu0 %1775
    %1779 = vset.pattern.permute.xlu0 0
    %1780 = vperm.xlu0 %1779, %v1734
    %v1781 = vpop.permute.xlu0 %1780
    %1784 = vset.pattern.permute.xlu0 0
    %1785 = vperm.xlu0 %1784, %v1735
    %v1786 = vpop.permute.xlu0 %1785
    %1789 = vset.pattern.permute.xlu0 0
    %1790 = vperm.xlu0 %1789, %v1736
    %v1791 = vpop.permute.xlu0 %1790
    %1794 = vset.pattern.permute.xlu0 0
    %1795 = vperm.xlu0 %1794, %v1737
    %v1796 = vpop.permute.xlu0 %1795
    %1799 = vset.pattern.permute.xlu0 0
    %1800 = vperm.xlu0 %1799, %v1738
    %v1801 = vpop.permute.xlu0 %1800
    %1804 = vset.pattern.permute.xlu0 0
    %1805 = vperm.xlu0 %1804, %v1739
    %v1806 = vpop.permute.xlu0 %1805
    %1809 = vset.pattern.permute.xlu0 0
    %1810 = vperm.xlu0 %1809, %v1740
    %v1811 = vpop.permute.xlu0 %1810
    %1814 = vset.pattern.permute.xlu0 0
    %1815 = vperm.xlu0 %1814, %v1741
    %v1816 = vpop.permute.xlu0 %1815
    %1819 = vset.pattern.permute.xlu0 0
    %1820 = vperm.xlu0 %1819, %v1742
    %v1821 = vpop.permute.xlu0 %1820
    %1824 = vset.pattern.permute.xlu0 0
    %1825 = vperm.xlu0 %1824, %v1743
    %v1826 = vpop.permute.xlu0 %1825
    %1829 = vset.pattern.permute.xlu0 0
    %1830 = vperm.xlu0 %1829, %v1744
    %v1831 = vpop.permute.xlu0 %1830
    %1834 = vset.pattern.permute.xlu0 0
    %1835 = vperm.xlu0 %1834, %v1745
    %v1836 = vpop.permute.xlu0 %1835
    %1839 = vset.pattern.permute.xlu0 0
    %1840 = vperm.xlu0 %1839, %v1746
    %v1841 = vpop.permute.xlu0 %1840
    %1844 = vset.pattern.permute.xlu0 0
    %1845 = vperm.xlu0 %1844, %v1747
    %v1846 = vpop.permute.xlu0 %1845
    %1849 = vset.pattern.permute.xlu0 0
    %1850 = vperm.xlu0 %1849, %v1748
    %v1851 = vpop.permute.xlu0 %1850
    %1854 = vset.pattern.permute.xlu0 0
    %1855 = vperm.xlu0 %1854, %v1749
    %v1856 = vpop.permute.xlu0 %1855
    %1859 = vset.pattern.permute.xlu0 0
    %1860 = vperm.xlu0 %1859, %v1750
    %v1861 = vpop.permute.xlu0 %1860
    %1864 = vset.pattern.permute.xlu0 0
    %1865 = vperm.xlu0 %1864, %v1751
    %v1866 = vpop.permute.xlu0 %1865
    %1869 = vset.pattern.permute.xlu0 0
    %1870 = vperm.xlu0 %1869, %v1752
    %v1871 = vpop.permute.xlu0 %1870
    %1874 = vset.pattern.permute.xlu0 0
    %1875 = vperm.xlu0 %1874, %v1753
    %v1876 = vpop.permute.xlu0 %1875
    %1879 = vset.pattern.permute.xlu0 0
    %1880 = vperm.xlu0 %1879, %v1754
    %v1881 = vpop.permute.xlu0 %1880
    %1884 = vset.pattern.permute.xlu0 0
    %1885 = vperm.xlu0 %1884, %v1755
    %v1886 = vpop.permute.xlu0 %1885
    %1889 = vset.pattern.permute.xlu0 0
    %1890 = vperm.xlu0 %1889, %v1756
    %v1891 = vpop.permute.xlu0 %1890
    %1894 = vset.pattern.permute.xlu0 0
    %1895 = vperm.xlu0 %1894, %v1757
    %v1896 = vpop.permute.xlu0 %1895
    %1899 = vset.pattern.permute.xlu0 0
    %1900 = vperm.xlu0 %1899, %v1758
    %v1901 = vpop.permute.xlu0 %1900
    %1904 = vset.pattern.permute.xlu0 0
    %1905 = vperm.xlu0 %1904, %v1759
    %v1906 = vpop.permute.xlu0 %1905
    %1909 = vset.pattern.permute.xlu0 0
    %1910 = vperm.xlu0 %1909, %v1760
    %v1911 = vpop.permute.xlu0 %1910
    %1914 = vset.pattern.permute.xlu0 0
    %1915 = vperm.xlu0 %1914, %v1761
    %v1916 = vpop.permute.xlu0 %1915
    %1919 = vset.pattern.permute.xlu0 0
    %1920 = vperm.xlu0 %1919, %v1762
    %v1921 = vpop.permute.xlu0 %1920
    %1923 = vmatprep.subr.mxu0 0.0
    %1924 = vmatpush1.msra.mxu0 %v1635
    %1925 = vmatprep.subr.mxu0 0.0
    %1926 = vmatpush1.msra.mxu0 %v1636
    %1927 = vmatprep.subr.mxu0 0.0
    %1928 = vmatpush1.msra.mxu0 %v1637
    %1929 = vmatprep.subr.mxu0 0.0
    %1930 = vmatpush1.msra.mxu0 %v1638
    %1931 = vmatprep.subr.mxu0 0.0
    %1932 = vmatpush1.msra.mxu0 %v1639
    %1933 = vmatprep.subr.mxu0 0.0
    %1934 = vmatpush1.msra.mxu0 %v1640
    %1935 = vmatprep.subr.mxu0 0.0
    %1936 = vmatpush1.msra.mxu0 %v1641
    %1937 = vmatprep.subr.mxu0 0.0
    %1938 = vmatpush1.msra.mxu0 %v1642
    %1939 = vmatprep.subr.mxu0 0.0
    %1940 = vmatpush1.msra.mxu0 %v1643
    %1941 = vmatprep.subr.mxu0 0.0
    %1942 = vmatpush1.msra.mxu0 %v1644
    %1943 = vmatprep.subr.mxu0 0.0
    %1944 = vmatpush1.msra.mxu0 %v1645
    %1945 = vmatprep.subr.mxu0 0.0
    %1946 = vmatpush1.msra.mxu0 %v1646
    %1947 = vmatprep.subr.mxu0 0.0
    %1948 = vmatpush1.msra.mxu0 %v1647
    %1949 = vmatprep.subr.mxu0 0.0
    %1950 = vmatpush1.msra.mxu0 %v1648
    %1951 = vmatprep.subr.mxu0 0.0
    %1952 = vmatpush1.msra.mxu0 %v1649
    %1953 = vmatprep.subr.mxu0 0.0
    %1954 = vmatpush1.msra.mxu0 %v1650
    %1955 = vmatprep.subr.mxu0 0.0
    %1956 = vmatpush1.msra.mxu0 %v1651
    %1957 = vmatprep.subr.mxu0 0.0
    %1958 = vmatpush1.msra.mxu0 %v1652
    %1959 = vmatprep.subr.mxu0 0.0
    %1960 = vmatpush1.msra.mxu0 %v1653
    %1961 = vmatprep.subr.mxu0 0.0
    %1962 = vmatpush1.msra.mxu0 %v1654
    %1963 = vmatprep.subr.mxu0 0.0
    %1964 = vmatpush1.msra.mxu0 %v1655
    %1965 = vmatprep.subr.mxu0 0.0
    %1966 = vmatpush1.msra.mxu0 %v1656
    %1967 = vmatprep.subr.mxu0 0.0
    %1968 = vmatpush1.msra.mxu0 %v1657
    %1969 = vmatprep.subr.mxu0 0.0
    %1970 = vmatpush1.msra.mxu0 %v1658
    %1971 = vmatprep.subr.mxu0 0.0
    %1972 = vmatpush1.msra.mxu0 %v1659
    %1973 = vmatprep.subr.mxu0 0.0
    %1974 = vmatpush1.msra.mxu0 %v1660
    %1975 = vmatprep.subr.mxu0 0.0
    %1976 = vmatpush1.msra.mxu0 %v1661
    %1977 = vmatprep.subr.mxu0 0.0
    %1978 = vmatpush1.msra.mxu0 %v1662
    %1979 = vmatprep.subr.mxu0 0.0
    %1980 = vmatpush1.msra.mxu0 %v1663
    %1981 = vmatprep.subr.mxu0 0.0
    %1982 = vmatpush1.msra.mxu0 %v1664
    %1983 = vmatprep.subr.mxu0 0.0
    %1984 = vmatpush1.msra.mxu0 %v1665
    %1985 = vmatprep.subr.mxu0 0.0
    %1986 = vmatpush1.msra.mxu0 %v1666
    %1987 = vmatprep.mubr.f32.mxu0 %v1668
    %1988 = vmatmul.mubr.f32.gmra.mrb[0].mxu0 %v1667
    %v1989 = vpop.f32.mrb[0].mxu0
    %v1990 = vadd.f32 %v1766, %v1989
    %v1991 = vpop.f32.mrb[0].mxu0
    %1992 = vmatprep.mubr.f32.mxu0 %v1670
    %1993 = vmatmul.mubr.f32.gmra.mrb[0].mxu0 %v1669
    %v1994 = vpop.f32.mrb[0].mxu0
    %v1995 = vadd.f32 %v1771, %v1994
    %v1996 = vpop.f32.mrb[0].mxu0
    %1997 = vmatprep.mubr.f32.mxu0 %v1672
    %1998 = vmatmul.mubr.f32.gmra.mrb[0].mxu0 %v1671
    %v1999 = vpop.f32.mrb[0].mxu0
    %v2000 = vadd.f32 %v1776, %v1999
    %v2001 = vpop.f32.mrb[0].mxu0
    %2002 = vmatprep.mubr.f32.mxu0 %v1674
    %2003 = vmatmul.mubr.f32.gmra.mrb[0].mxu0 %v1673
    %v2004 = vpop.f32.mrb[0].mxu0
    %v2005 = vadd.f32 %v1781, %v2004
    %v2006 = vpop.f32.mrb[0].mxu0
    %2007 = vmatprep.mubr.f32.mxu0 %v1676
    %2008 = vmatmul.mubr.f32.gmra.mrb[0].mxu0 %v1675
    %v2009 = vpop.f32.mrb[0].mxu0
    %v2010 = vadd.f32 %v1786, %v2009
    %v2011 = vpop.f32.mrb[0].mxu0
    %2012 = vmatprep.mubr.f32.mxu0 %v1678
    %2013 = vmatmul.mubr.f32.gmra.mrb[0].mxu0 %v1677
    %v2014 = vpop.f32.mrb[0].mxu0
    %v2015 = vadd.f32 %v1791, %v2014
    %v2016 = vpop.f32.mrb[0].mxu0
    %2017 = vmatprep.mubr.f32.mxu0 %v1680
    %2018 = vmatmul.mubr.f32.gmra.mrb[0].mxu0 %v1679
    %v2019 = vpop.f32.mrb[0].mxu0
    %v2020 = vadd.f32 %v1796, %v2019
    %v2021 = vpop.f32.mrb[0].mxu0
    %2022 = vmatprep.mubr.f32.mxu0 %v1682
    %2023 = vmatmul.mubr.f32.gmra.mrb[0].mxu0 %v1681
    %v2024 = vpop.f32.mrb[0].mxu0
    %v2025 = vadd.f32 %v1801, %v2024
    %v2026 = vpop.f32.mrb[0].mxu0
    %2027 = vmatprep.mubr.f32.mxu0 %v1684
    %2028 = vmatmul.mubr.f32.gmra.mrb[0].mxu0 %v1683
    %v2029 = vpop.f32.mrb[0].mxu0
    %v2030 = vadd.f32 %v1806, %v2029
    %v2031 = vpop.f32.mrb[0].mxu0
    %2032 = vmatprep.mubr.f32.mxu0 %v1686
    %2033 = vmatmul.mubr.f32.gmra.mrb[0].mxu0 %v1685
    %v2034 = vpop.f32.mrb[0].mxu0
    %v2035 = vadd.f32 %v1811, %v2034
    %v2036 = vpop.f32.mrb[0].mxu0
    %2037 = vmatprep.mubr.f32.mxu0 %v1688
    %2038 = vmatmul.mubr.f32.gmra.mrb[0].mxu0 %v1687
    %v2039 = vpop.f32.mrb[0].mxu0
    %v2040 = vadd.f32 %v1816, %v2039
    %v2041 = vpop.f32.mrb[0].mxu0
    %2042 = vmatprep.mubr.f32.mxu0 %v1690
    %2043 = vmatmul.mubr.f32.gmra.mrb[0].mxu0 %v1689
    %v2044 = vpop.f32.mrb[0].mxu0
    %v2045 = vadd.f32 %v1821, %v2044
    %v2046 = vpop.f32.mrb[0].mxu0
    %2047 = vmatprep.mubr.f32.mxu0 %v1692
    %2048 = vmatmul.mubr.f32.gmra.mrb[0].mxu0 %v1691
    %v2049 = vpop.f32.mrb[0].mxu0
    %v2050 = vadd.f32 %v1826, %v2049
    %v2051 = vpop.f32.mrb[0].mxu0
    %2052 = vmatprep.mubr.f32.mxu0 %v1694
    %2053 = vmatmul.mubr.f32.gmra.mrb[0].mxu0 %v1693
    %v2054 = vpop.f32.mrb[0].mxu0
    %v2055 = vadd.f32 %v1831, %v2054
    %v2056 = vpop.f32.mrb[0].mxu0
    %2057 = vmatprep.mubr.f32.mxu0 %v1696
    %2058 = vmatmul.mubr.f32.gmra.mrb[0].mxu0 %v1695
    %v2059 = vpop.f32.mrb[0].mxu0
    %v2060 = vadd.f32 %v1836, %v2059
    %v2061 = vpop.f32.mrb[0].mxu0
    %2062 = vmatprep.mubr.f32.mxu0 %v1698
    %2063 = vmatmul.mubr.f32.gmra.mrb[0].mxu0 %v1697
    %v2064 = vpop.f32.mrb[0].mxu0
    %v2065 = vadd.f32 %v1841, %v2064
    %v2066 = vpop.f32.mrb[0].mxu0
    %2067 = vmatprep.mubr.f32.mxu0 %v1700
    %2068 = vmatmul.mubr.f32.gmra.mrb[0].mxu0 %v1699
    %v2069 = vpop.f32.mrb[0].mxu0
    %v2070 = vadd.f32 %v1846, %v2069
    %v2071 = vpop.f32.mrb[0].mxu0
    %2072 = vmatprep.mubr.f32.mxu0 %v1702
    %2073 = vmatmul.mubr.f32.gmra.mrb[0].mxu0 %v1701
    %v2074 = vpop.f32.mrb[0].mxu0
    %v2075 = vadd.f32 %v1851, %v2074
    %v2076 = vpop.f32.mrb[0].mxu0
    %2077 = vmatprep.mubr.f32.mxu0 %v1704
    %2078 = vmatmul.mubr.f32.gmra.mrb[0].mxu0 %v1703
    %v2079 = vpop.f32.mrb[0].mxu0
    %v2080 = vadd.f32 %v1856, %v2079
    %v2081 = vpop.f32.mrb[0].mxu0
    %2082 = vmatprep.mubr.f32.mxu0 %v1706
    %2083 = vmatmul.mubr.f32.gmra.mrb[0].mxu0 %v1705
    %v2084 = vpop.f32.mrb[0].mxu0
    %v2085 = vadd.f32 %v1861, %v2084
    %v2086 = vpop.f32.mrb[0].mxu0
    %2087 = vmatprep.mubr.f32.mxu0 %v1708
    %2088 = vmatmul.mubr.f32.gmra.mrb[0].mxu0 %v1707
    %v2089 = vpop.f32.mrb[0].mxu0
    %v2090 = vadd.f32 %v1866, %v2089
    %v2091 = vpop.f32.mrb[0].mxu0
    %2092 = vmatprep.mubr.f32.mxu0 %v1710
    %2093 = vmatmul.mubr.f32.gmra.mrb[0].mxu0 %v1709
    %v2094 = vpop.f32.mrb[0].mxu0
    %v2095 = vadd.f32 %v1871, %v2094
    %v2096 = vpop.f32.mrb[0].mxu0
    %2097 = vmatprep.mubr.f32.mxu0 %v1712
    %2098 = vmatmul.mubr.f32.gmra.mrb[0].mxu0 %v1711
    %v2099 = vpop.f32.mrb[0].mxu0
    %v2100 = vadd.f32 %v1876, %v2099
    %v2101 = vpop.f32.mrb[0].mxu0
    %2102 = vmatprep.mubr.f32.mxu0 %v1714
    %2103 = vmatmul.mubr.f32.gmra.mrb[0].mxu0 %v1713
    %v2104 = vpop.f32.mrb[0].mxu0
    %v2105 = vadd.f32 %v1881, %v2104
    %v2106 = vpop.f32.mrb[0].mxu0
    %2107 = vmatprep.mubr.f32.mxu0 %v1716
    %2108 = vmatmul.mubr.f32.gmra.mrb[0].mxu0 %v1715
    %v2109 = vpop.f32.mrb[0].mxu0
    %v2110 = vadd.f32 %v1886, %v2109
    %v2111 = vpop.f32.mrb[0].mxu0
    %2112 = vmatprep.mubr.f32.mxu0 %v1718
    %2113 = vmatmul.mubr.f32.gmra.mrb[0].mxu0 %v1717
    %v2114 = vpop.f32.mrb[0].mxu0
    %v2115 = vadd.f32 %v1891, %v2114
    %v2116 = vpop.f32.mrb[0].mxu0
    %2117 = vmatprep.mubr.f32.mxu0 %v1720
    %2118 = vmatmul.mubr.f32.gmra.mrb[0].mxu0 %v1719
    %v2119 = vpop.f32.mrb[0].mxu0
    %v2120 = vadd.f32 %v1896, %v2119
    %v2121 = vpop.f32.mrb[0].mxu0
    %2122 = vmatprep.mubr.f32.mxu0 %v1722
    %2123 = vmatmul.mubr.f32.gmra.mrb[0].mxu0 %v1721
    %v2124 = vpop.f32.mrb[0].mxu0
    %v2125 = vadd.f32 %v1901, %v2124
    %v2126 = vpop.f32.mrb[0].mxu0
    %2127 = vmatprep.mubr.f32.mxu0 %v1724
    %2128 = vmatmul.mubr.f32.gmra.mrb[0].mxu0 %v1723
    %v2129 = vpop.f32.mrb[0].mxu0
    %v2130 = vadd.f32 %v1906, %v2129
    %v2131 = vpop.f32.mrb[0].mxu0
    %2132 = vmatprep.mubr.f32.mxu0 %v1726
    %2133 = vmatmul.mubr.f32.gmra.mrb[0].mxu0 %v1725
    %v2134 = vpop.f32.mrb[0].mxu0
    %v2135 = vadd.f32 %v1911, %v2134
    %v2136 = vpop.f32.mrb[0].mxu0
    %2137 = vmatprep.mubr.f32.mxu0 %v1728
    %2138 = vmatmul.mubr.f32.gmra.mrb[0].mxu0 %v1727
    %v2139 = vpop.f32.mrb[0].mxu0
    %v2140 = vadd.f32 %v1916, %v2139
    %v2141 = vpop.f32.mrb[0].mxu0
    %2142 = vmatprep.mubr.f32.mxu0 %v1730
    %2143 = vmatmul.mubr.f32.gmra.mrb[0].mxu0 %v1729
    %v2144 = vpop.f32.mrb[0].mxu0
    %v2145 = vadd.f32 %v1921, %v2144
    %v2146 = vpop.f32.mrb[0].mxu0
    %2147 = vdwg.mxu0
    %v2148 = vtanh.pop %v1990
    %v2149 = vtanh.pop %v1995
    %v2150 = vtanh.pop %v2000
    %v2151 = vtanh.pop %v2005
    %v2152 = vtanh.pop %v2010
    %v2153 = vtanh.pop %v2015
    %v2154 = vtanh.pop %v2020
    %v2155 = vtanh.pop %v2025
    %v2156 = vtanh.pop %v2030
    %v2157 = vtanh.pop %v2035
    %v2158 = vtanh.pop %v2040
    %v2159 = vtanh.pop %v2045
    %v2160 = vtanh.pop %v2050
    %v2161 = vtanh.pop %v2055
    %v2162 = vtanh.pop %v2060
    %v2163 = vtanh.pop %v2065
    %v2164 = vtanh.pop %v2070
    %v2165 = vtanh.pop %v2075
    %v2166 = vtanh.pop %v2080
    %v2167 = vtanh.pop %v2085
    %v2168 = vtanh.pop %v2090
    %v2169 = vtanh.pop %v2095
    %v2170 = vtanh.pop %v2100
    %v2171 = vtanh.pop %v2105
    %v2172 = vtanh.pop %v2110
    %v2173 = vtanh.pop %v2115
    %v2174 = vtanh.pop %v2120
    %v2175 = vtanh.pop %v2125
    %v2176 = vtanh.pop %v2130
    %v2177 = vtanh.pop %v2135
    %v2178 = vtanh.pop %v2140
    %v2179 = vtanh.pop %v2145
    %v2180 = vld [vmem:[#allocation2] sm:$0xff]
    %v2181 = vld [vmem:[#allocation2 + $0x8] sm:$0xff]
    %v2182 = vld [vmem:[#allocation2 + $0x10] sm:$0xff]
    %v2183 = vld [vmem:[#allocation2 + $0x18] sm:$0xff]
    %v2184 = vld [vmem:[#allocation2 + $0x20] sm:$0xff]
    %v2185 = vld [vmem:[#allocation2 + $0x28] sm:$0xff]
    %v2186 = vld [vmem:[#allocation2 + $0x30] sm:$0xff]
    %v2187 = vld [vmem:[#allocation2 + $0x38] sm:$0xff]
    %v2188 = vld [vmem:[#allocation2 + $0x40] sm:$0xff]
    %v2189 = vld [vmem:[#allocation2 + $0x48] sm:$0xff]
    %v2190 = vld [vmem:[#allocation2 + $0x50] sm:$0xff]
    %v2191 = vld [vmem:[#allocation2 + $0x58] sm:$0xff]
    %v2192 = vld [vmem:[#allocation2 + $0x60] sm:$0xff]
    %v2193 = vld [vmem:[#allocation2 + $0x68] sm:$0xff]
    %v2194 = vld [vmem:[#allocation2 + $0x70] sm:$0xff]
    %v2195 = vld [vmem:[#allocation2 + $0x78] sm:$0xff]
    %v2196 = vld [vmem:[#allocation2 + $0x80] sm:$0xff]
    %v2197 = vld [vmem:[#allocation2 + $0x88] sm:$0xff]
    %v2198 = vld [vmem:[#allocation2 + $0x90] sm:$0xff]
    %v2199 = vld [vmem:[#allocation2 + $0x98] sm:$0xff]
    %v2200 = vld [vmem:[#allocation2 + $0xa0] sm:$0xff]
    %v2201 = vld [vmem:[#allocation2 + $0xa8] sm:$0xff]
    %v2202 = vld [vmem:[#allocation2 + $0xb0] sm:$0xff]
    %v2203 = vld [vmem:[#allocation2 + $0xb8] sm:$0xff]
    %v2204 = vld [vmem:[#allocation2 + $0xc0] sm:$0xff]
    %v2205 = vld [vmem:[#allocation2 + $0xc8] sm:$0xff]
    %v2206 = vld [vmem:[#allocation2 + $0xd0] sm:$0xff]
    %v2207 = vld [vmem:[#allocation2 + $0xd8] sm:$0xff]
    %v2208 = vld [vmem:[#allocation2 + $0xe0] sm:$0xff]
    %v2209 = vld [vmem:[#allocation2 + $0xe8] sm:$0xff]
    %v2210 = vld [vmem:[#allocation2 + $0xf0] sm:$0xff]
    %v2211 = vld [vmem:[#allocation2 + $0xf8] sm:$0xff]
    %v2212 = vld [vmem:[#allocation2 + $0x100] sm:$0xff]
    %v2213 = vld [vmem:[#allocation2 + $0x108] sm:$0xff]
    %v2214 = vld [vmem:[#allocation2 + $0x110] sm:$0xff]
    %v2215 = vld [vmem:[#allocation2 + $0x118] sm:$0xff]
    %v2216 = vld [vmem:[#allocation2 + $0x120] sm:$0xff]
    %v2217 = vld [vmem:[#allocation2 + $0x128] sm:$0xff]
    %v2218 = vld [vmem:[#allocation2 + $0x130] sm:$0xff]
    %v2219 = vld [vmem:[#allocation2 + $0x138] sm:$0xff]
    %v2220 = vld [vmem:[#allocation2 + $0x140] sm:$0xff]
    %v2221 = vld [vmem:[#allocation2 + $0x148] sm:$0xff]
    %v2222 = vld [vmem:[#allocation2 + $0x150] sm:$0xff]
    %v2223 = vld [vmem:[#allocation2 + $0x158] sm:$0xff]
    %v2224 = vld [vmem:[#allocation2 + $0x160] sm:$0xff]
    %v2225 = vld [vmem:[#allocation2 + $0x168] sm:$0xff]
    %v2226 = vld [vmem:[#allocation2 + $0x170] sm:$0xff]
    %v2227 = vld [vmem:[#allocation2 + $0x178] sm:$0xff]
    %v2228 = vld [vmem:[#allocation2 + $0x180] sm:$0xff]
    %v2229 = vld [vmem:[#allocation2 + $0x188] sm:$0xff]
    %v2230 = vld [vmem:[#allocation2 + $0x190] sm:$0xff]
    %v2231 = vld [vmem:[#allocation2 + $0x198] sm:$0xff]
    %v2232 = vld [vmem:[#allocation2 + $0x1a0] sm:$0xff]
    %v2233 = vld [vmem:[#allocation2 + $0x1a8] sm:$0xff]
    %v2234 = vld [vmem:[#allocation2 + $0x1b0] sm:$0xff]
    %v2235 = vld [vmem:[#allocation2 + $0x1b8] sm:$0xff]
    %v2236 = vld [vmem:[#allocation2 + $0x1c0] sm:$0xff]
    %v2237 = vld [vmem:[#allocation2 + $0x1c8] sm:$0xff]
    %v2238 = vld [vmem:[#allocation2 + $0x1d0] sm:$0xff]
    %v2239 = vld [vmem:[#allocation2 + $0x1d8] sm:$0xff]
    %v2240 = vld [vmem:[#allocation2 + $0x1e0] sm:$0xff]
    %v2241 = vld [vmem:[#allocation2 + $0x1e8] sm:$0xff]
    %v2242 = vld [vmem:[#allocation2 + $0x1f0] sm:$0xff]
    %v2243 = vld [vmem:[#allocation2 + $0x1f8] sm:$0xff]
    %v2244 = vld [vmem:[%s10] sm:$0xff]
    %v2245 = vld [vmem:[%s10 + $0x8] sm:$0xff]
    %v2246 = vld [vmem:[%s10 + $0x10] sm:$0xff]
    %v2247 = vld [vmem:[%s10 + $0x18] sm:$0xff]
    %v2248 = vld [vmem:[%s10 + $0x20] sm:$0xff]
    %v2249 = vld [vmem:[%s10 + $0x28] sm:$0xff]
    %v2250 = vld [vmem:[%s10 + $0x30] sm:$0xff]
    %v2251 = vld [vmem:[%s10 + $0x38] sm:$0xff]
    %v2252 = vld [vmem:[%s10 + $0x40] sm:$0xff]
    %v2253 = vld [vmem:[%s10 + $0x48] sm:$0xff]
    %v2254 = vld [vmem:[%s10 + $0x50] sm:$0xff]
    %v2255 = vld [vmem:[%s10 + $0x58] sm:$0xff]
    %v2256 = vld [vmem:[%s10 + $0x60] sm:$0xff]
    %v2257 = vld [vmem:[%s10 + $0x68] sm:$0xff]
    %v2258 = vld [vmem:[%s10 + $0x70] sm:$0xff]
    %v2259 = vld [vmem:[%s10 + $0x78] sm:$0xff]
    %v2260 = vld [vmem:[%s10 + $0x80] sm:$0xff]
    %v2261 = vld [vmem:[%s10 + $0x88] sm:$0xff]
    %v2262 = vld [vmem:[%s10 + $0x90] sm:$0xff]
    %v2263 = vld [vmem:[%s10 + $0x98] sm:$0xff]
    %v2264 = vld [vmem:[%s10 + $0xa0] sm:$0xff]
    %v2265 = vld [vmem:[%s10 + $0xa8] sm:$0xff]
    %v2266 = vld [vmem:[%s10 + $0xb0] sm:$0xff]
    %v2267 = vld [vmem:[%s10 + $0xb8] sm:$0xff]
    %v2268 = vld [vmem:[%s10 + $0xc0] sm:$0xff]
    %v2269 = vld [vmem:[%s10 + $0xc8] sm:$0xff]
    %v2270 = vld [vmem:[%s10 + $0xd0] sm:$0xff]
    %v2271 = vld [vmem:[%s10 + $0xd8] sm:$0xff]
    %v2272 = vld [vmem:[%s10 + $0xe0] sm:$0xff]
    %v2273 = vld [vmem:[%s10 + $0xe8] sm:$0xff]
    %v2274 = vld [vmem:[%s10 + $0xf0] sm:$0xff]
    %v2275 = vld [vmem:[%s10 + $0xf8] sm:$0xff]
    %2277 = vset.pattern.permute.xlu0 0
    %2278 = vperm.xlu0 %2277, %v2244
    %v2279 = vpop.permute.xlu0 %2278
    %2282 = vset.pattern.permute.xlu0 0
    %2283 = vperm.xlu0 %2282, %v2245
    %v2284 = vpop.permute.xlu0 %2283
    %2287 = vset.pattern.permute.xlu0 0
    %2288 = vperm.xlu0 %2287, %v2246
    %v2289 = vpop.permute.xlu0 %2288
    %2292 = vset.pattern.permute.xlu0 0
    %2293 = vperm.xlu0 %2292, %v2247
    %v2294 = vpop.permute.xlu0 %2293
    %2297 = vset.pattern.permute.xlu0 0
    %2298 = vperm.xlu0 %2297, %v2248
    %v2299 = vpop.permute.xlu0 %2298
    %2302 = vset.pattern.permute.xlu0 0
    %2303 = vperm.xlu0 %2302, %v2249
    %v2304 = vpop.permute.xlu0 %2303
    %2307 = vset.pattern.permute.xlu0 0
    %2308 = vperm.xlu0 %2307, %v2250
    %v2309 = vpop.permute.xlu0 %2308
    %2312 = vset.pattern.permute.xlu0 0
    %2313 = vperm.xlu0 %2312, %v2251
    %v2314 = vpop.permute.xlu0 %2313
    %2317 = vset.pattern.permute.xlu0 0
    %2318 = vperm.xlu0 %2317, %v2252
    %v2319 = vpop.permute.xlu0 %2318
    %2322 = vset.pattern.permute.xlu0 0
    %2323 = vperm.xlu0 %2322, %v2253
    %v2324 = vpop.permute.xlu0 %2323
    %2327 = vset.pattern.permute.xlu0 0
    %2328 = vperm.xlu0 %2327, %v2254
    %v2329 = vpop.permute.xlu0 %2328
    %2332 = vset.pattern.permute.xlu0 0
    %2333 = vperm.xlu0 %2332, %v2255
    %v2334 = vpop.permute.xlu0 %2333
    %2337 = vset.pattern.permute.xlu0 0
    %2338 = vperm.xlu0 %2337, %v2256
    %v2339 = vpop.permute.xlu0 %2338
    %2342 = vset.pattern.permute.xlu0 0
    %2343 = vperm.xlu0 %2342, %v2257
    %v2344 = vpop.permute.xlu0 %2343
    %2347 = vset.pattern.permute.xlu0 0
    %2348 = vperm.xlu0 %2347, %v2258
    %v2349 = vpop.permute.xlu0 %2348
    %2352 = vset.pattern.permute.xlu0 0
    %2353 = vperm.xlu0 %2352, %v2259
    %v2354 = vpop.permute.xlu0 %2353
    %2357 = vset.pattern.permute.xlu0 0
    %2358 = vperm.xlu0 %2357, %v2260
    %v2359 = vpop.permute.xlu0 %2358
    %2362 = vset.pattern.permute.xlu0 0
    %2363 = vperm.xlu0 %2362, %v2261
    %v2364 = vpop.permute.xlu0 %2363
    %2367 = vset.pattern.permute.xlu0 0
    %2368 = vperm.xlu0 %2367, %v2262
    %v2369 = vpop.permute.xlu0 %2368
    %2372 = vset.pattern.permute.xlu0 0
    %2373 = vperm.xlu0 %2372, %v2263
    %v2374 = vpop.permute.xlu0 %2373
    %2377 = vset.pattern.permute.xlu0 0
    %2378 = vperm.xlu0 %2377, %v2264
    %v2379 = vpop.permute.xlu0 %2378
    %2382 = vset.pattern.permute.xlu0 0
    %2383 = vperm.xlu0 %2382, %v2265
    %v2384 = vpop.permute.xlu0 %2383
    %2387 = vset.pattern.permute.xlu0 0
    %2388 = vperm.xlu0 %2387, %v2266
    %v2389 = vpop.permute.xlu0 %2388
    %2392 = vset.pattern.permute.xlu0 0
    %2393 = vperm.xlu0 %2392, %v2267
    %v2394 = vpop.permute.xlu0 %2393
    %2397 = vset.pattern.permute.xlu0 0
    %2398 = vperm.xlu0 %2397, %v2268
    %v2399 = vpop.permute.xlu0 %2398
    %2402 = vset.pattern.permute.xlu0 0
    %2403 = vperm.xlu0 %2402, %v2269
    %v2404 = vpop.permute.xlu0 %2403
    %2407 = vset.pattern.permute.xlu0 0
    %2408 = vperm.xlu0 %2407, %v2270
    %v2409 = vpop.permute.xlu0 %2408
    %2412 = vset.pattern.permute.xlu0 0
    %2413 = vperm.xlu0 %2412, %v2271
    %v2414 = vpop.permute.xlu0 %2413
    %2417 = vset.pattern.permute.xlu0 0
    %2418 = vperm.xlu0 %2417, %v2272
    %v2419 = vpop.permute.xlu0 %2418
    %2422 = vset.pattern.permute.xlu0 0
    %2423 = vperm.xlu0 %2422, %v2273
    %v2424 = vpop.permute.xlu0 %2423
    %2427 = vset.pattern.permute.xlu0 0
    %2428 = vperm.xlu0 %2427, %v2274
    %v2429 = vpop.permute.xlu0 %2428
    %2432 = vset.pattern.permute.xlu0 0
    %2433 = vperm.xlu0 %2432, %v2275
    %v2434 = vpop.permute.xlu0 %2433
    %2436 = vmatprep.subr.mxu0 0.0
    %2437 = vmatpush1.msra.mxu0 %v2148
    %2438 = vmatprep.subr.mxu0 0.0
    %2439 = vmatpush1.msra.mxu0 %v2149
    %2440 = vmatprep.subr.mxu0 0.0
    %2441 = vmatpush1.msra.mxu0 %v2150
    %2442 = vmatprep.subr.mxu0 0.0
    %2443 = vmatpush1.msra.mxu0 %v2151
    %2444 = vmatprep.subr.mxu0 0.0
    %2445 = vmatpush1.msra.mxu0 %v2152
    %2446 = vmatprep.subr.mxu0 0.0
    %2447 = vmatpush1.msra.mxu0 %v2153
    %2448 = vmatprep.subr.mxu0 0.0
    %2449 = vmatpush1.msra.mxu0 %v2154
    %2450 = vmatprep.subr.mxu0 0.0
    %2451 = vmatpush1.msra.mxu0 %v2155
    %2452 = vmatprep.subr.mxu0 0.0
    %2453 = vmatpush1.msra.mxu0 %v2156
    %2454 = vmatprep.subr.mxu0 0.0
    %2455 = vmatpush1.msra.mxu0 %v2157
    %2456 = vmatprep.subr.mxu0 0.0
    %2457 = vmatpush1.msra.mxu0 %v2158
    %2458 = vmatprep.subr.mxu0 0.0
    %2459 = vmatpush1.msra.mxu0 %v2159
    %2460 = vmatprep.subr.mxu0 0.0
    %2461 = vmatpush1.msra.mxu0 %v2160
    %2462 = vmatprep.subr.mxu0 0.0
    %2463 = vmatpush1.msra.mxu0 %v2161
    %2464 = vmatprep.subr.mxu0 0.0
    %2465 = vmatpush1.msra.mxu0 %v2162
    %2466 = vmatprep.subr.mxu0 0.0
    %2467 = vmatpush1.msra.mxu0 %v2163
    %2468 = vmatprep.subr.mxu0 0.0
    %2469 = vmatpush1.msra.mxu0 %v2164
    %2470 = vmatprep.subr.mxu0 0.0
    %2471 = vmatpush1.msra.mxu0 %v2165
    %2472 = vmatprep.subr.mxu0 0.0
    %2473 = vmatpush1.msra.mxu0 %v2166
    %2474 = vmatprep.subr.mxu0 0.0
    %2475 = vmatpush1.msra.mxu0 %v2167
    %2476 = vmatprep.subr.mxu0 0.0
    %2477 = vmatpush1.msra.mxu0 %v2168
    %2478 = vmatprep.subr.mxu0 0.0
    %2479 = vmatpush1.msra.mxu0 %v2169
    %2480 = vmatprep.subr.mxu0 0.0
    %2481 = vmatpush1.msra.mxu0 %v2170
    %2482 = vmatprep.subr.mxu0 0.0
    %2483 = vmatpush1.msra.mxu0 %v2171
    %2484 = vmatprep.subr.mxu0 0.0
    %2485 = vmatpush1.msra.mxu0 %v2172
    %2486 = vmatprep.subr.mxu0 0.0
    %2487 = vmatpush1.msra.mxu0 %v2173
    %2488 = vmatprep.subr.mxu0 0.0
    %2489 = vmatpush1.msra.mxu0 %v2174
    %2490 = vmatprep.subr.mxu0 0.0
    %2491 = vmatpush1.msra.mxu0 %v2175
    %2492 = vmatprep.subr.mxu0 0.0
    %2493 = vmatpush1.msra.mxu0 %v2176
    %2494 = vmatprep.subr.mxu0 0.0
    %2495 = vmatpush1.msra.mxu0 %v2177
    %2496 = vmatprep.subr.mxu0 0.0
    %2497 = vmatpush1.msra.mxu0 %v2178
    %2498 = vmatprep.subr.mxu0 0.0
    %2499 = vmatpush1.msra.mxu0 %v2179
    %2500 = vmatprep.mubr.f32.mxu0 %v2181
    %2501 = vmatmul.mubr.f32.gmra.mrb[0].mxu0 %v2180
    %v2502 = vpop.f32.mrb[0].mxu0
    %v2503 = vadd.f32 %v2279, %v2502
    %v2504 = vpop.f32.mrb[0].mxu0
    %2505 = vmatprep.mubr.f32.mxu0 %v2183
    %2506 = vmatmul.mubr.f32.gmra.mrb[0].mxu0 %v2182
    %v2507 = vpop.f32.mrb[0].mxu0
    %v2508 = vadd.f32 %v2284, %v2507
    %v2509 = vpop.f32.mrb[0].mxu0
    %2510 = vmatprep.mubr.f32.mxu0 %v2185
    %2511 = vmatmul.mubr.f32.gmra.mrb[0].mxu0 %v2184
    %v2512 = vpop.f32.mrb[0].mxu0
    %v2513 = vadd.f32 %v2289, %v2512
    %v2514 = vpop.f32.mrb[0].mxu0
    %2515 = vmatprep.mubr.f32.mxu0 %v2187
    %2516 = vmatmul.mubr.f32.gmra.mrb[0].mxu0 %v2186
    %v2517 = vpop.f32.mrb[0].mxu0
    %v2518 = vadd.f32 %v2294, %v2517
    %v2519 = vpop.f32.mrb[0].mxu0
    %2520 = vmatprep.mubr.f32.mxu0 %v2189
    %2521 = vmatmul.mubr.f32.gmra.mrb[0].mxu0 %v2188
    %v2522 = vpop.f32.mrb[0].mxu0
    %v2523 = vadd.f32 %v2299, %v2522
    %v2524 = vpop.f32.mrb[0].mxu0
    %2525 = vmatprep.mubr.f32.mxu0 %v2191
    %2526 = vmatmul.mubr.f32.gmra.mrb[0].mxu0 %v2190
    %v2527 = vpop.f32.mrb[0].mxu0
    %v2528 = vadd.f32 %v2304, %v2527
    %v2529 = vpop.f32.mrb[0].mxu0
    %2530 = vmatprep.mubr.f32.mxu0 %v2193
    %2531 = vmatmul.mubr.f32.gmra.mrb[0].mxu0 %v2192
    %v2532 = vpop.f32.mrb[0].mxu0
    %v2533 = vadd.f32 %v2309, %v2532
    %v2534 = vpop.f32.mrb[0].mxu0
    %2535 = vmatprep.mubr.f32.mxu0 %v2195
    %2536 = vmatmul.mubr.f32.gmra.mrb[0].mxu0 %v2194
    %v2537 = vpop.f32.mrb[0].mxu0
    %v2538 = vadd.f32 %v2314, %v2537
    %v2539 = vpop.f32.mrb[0].mxu0
    %2540 = vmatprep.mubr.f32.mxu0 %v2197
    %2541 = vmatmul.mubr.f32.gmra.mrb[0].mxu0 %v2196
    %v2542 = vpop.f32.mrb[0].mxu0
    %v2543 = vadd.f32 %v2319, %v2542
    %v2544 = vpop.f32.mrb[0].mxu0
    %2545 = vmatprep.mubr.f32.mxu0 %v2199
    %2546 = vmatmul.mubr.f32.gmra.mrb[0].mxu0 %v2198
    %v2547 = vpop.f32.mrb[0].mxu0
    %v2548 = vadd.f32 %v2324, %v2547
    %v2549 = vpop.f32.mrb[0].mxu0
    %2550 = vmatprep.mubr.f32.mxu0 %v2201
    %2551 = vmatmul.mubr.f32.gmra.mrb[0].mxu0 %v2200
    %v2552 = vpop.f32.mrb[0].mxu0
    %v2553 = vadd.f32 %v2329, %v2552
    %v2554 = vpop.f32.mrb[0].mxu0
    %2555 = vmatprep.mubr.f32.mxu0 %v2203
    %2556 = vmatmul.mubr.f32.gmra.mrb[0].mxu0 %v2202
    %v2557 = vpop.f32.mrb[0].mxu0
    %v2558 = vadd.f32 %v2334, %v2557
    %v2559 = vpop.f32.mrb[0].mxu0
    %2560 = vmatprep.mubr.f32.mxu0 %v2205
    %2561 = vmatmul.mubr.f32.gmra.mrb[0].mxu0 %v2204
    %v2562 = vpop.f32.mrb[0].mxu0
    %v2563 = vadd.f32 %v2339, %v2562
    %v2564 = vpop.f32.mrb[0].mxu0
    %2565 = vmatprep.mubr.f32.mxu0 %v2207
    %2566 = vmatmul.mubr.f32.gmra.mrb[0].mxu0 %v2206
    %v2567 = vpop.f32.mrb[0].mxu0
    %v2568 = vadd.f32 %v2344, %v2567
    %v2569 = vpop.f32.mrb[0].mxu0
    %2570 = vmatprep.mubr.f32.mxu0 %v2209
    %2571 = vmatmul.mubr.f32.gmra.mrb[0].mxu0 %v2208
    %v2572 = vpop.f32.mrb[0].mxu0
    %v2573 = vadd.f32 %v2349, %v2572
    %v2574 = vpop.f32.mrb[0].mxu0
    %2575 = vmatprep.mubr.f32.mxu0 %v2211
    %2576 = vmatmul.mubr.f32.gmra.mrb[0].mxu0 %v2210
    %v2577 = vpop.f32.mrb[0].mxu0
    %v2578 = vadd.f32 %v2354, %v2577
    %v2579 = vpop.f32.mrb[0].mxu0
    %2580 = vmatprep.mubr.f32.mxu0 %v2213
    %2581 = vmatmul.mubr.f32.gmra.mrb[0].mxu0 %v2212
    %v2582 = vpop.f32.mrb[0].mxu0
    %v2583 = vadd.f32 %v2359, %v2582
    %v2584 = vpop.f32.mrb[0].mxu0
    %2585 = vmatprep.mubr.f32.mxu0 %v2215
    %2586 = vmatmul.mubr.f32.gmra.mrb[0].mxu0 %v2214
    %v2587 = vpop.f32.mrb[0].mxu0
    %v2588 = vadd.f32 %v2364, %v2587
    %v2589 = vpop.f32.mrb[0].mxu0
    %2590 = vmatprep.mubr.f32.mxu0 %v2217
    %2591 = vmatmul.mubr.f32.gmra.mrb[0].mxu0 %v2216
    %v2592 = vpop.f32.mrb[0].mxu0
    %v2593 = vadd.f32 %v2369, %v2592
    %v2594 = vpop.f32.mrb[0].mxu0
    %2595 = vmatprep.mubr.f32.mxu0 %v2219
    %2596 = vmatmul.mubr.f32.gmra.mrb[0].mxu0 %v2218
    %v2597 = vpop.f32.mrb[0].mxu0
    %v2598 = vadd.f32 %v2374, %v2597
    %v2599 = vpop.f32.mrb[0].mxu0
    %2600 = vmatprep.mubr.f32.mxu0 %v2221
    %2601 = vmatmul.mubr.f32.gmra.mrb[0].mxu0 %v2220
    %v2602 = vpop.f32.mrb[0].mxu0
    %v2603 = vadd.f32 %v2379, %v2602
    %v2604 = vpop.f32.mrb[0].mxu0
    %2605 = vmatprep.mubr.f32.mxu0 %v2223
    %2606 = vmatmul.mubr.f32.gmra.mrb[0].mxu0 %v2222
    %v2607 = vpop.f32.mrb[0].mxu0
    %v2608 = vadd.f32 %v2384, %v2607
    %v2609 = vpop.f32.mrb[0].mxu0
    %2610 = vmatprep.mubr.f32.mxu0 %v2225
    %2611 = vmatmul.mubr.f32.gmra.mrb[0].mxu0 %v2224
    %v2612 = vpop.f32.mrb[0].mxu0
    %v2613 = vadd.f32 %v2389, %v2612
    %v2614 = vpop.f32.mrb[0].mxu0
    %2615 = vmatprep.mubr.f32.mxu0 %v2227
    %2616 = vmatmul.mubr.f32.gmra.mrb[0].mxu0 %v2226
    %v2617 = vpop.f32.mrb[0].mxu0
    %v2618 = vadd.f32 %v2394, %v2617
    %v2619 = vpop.f32.mrb[0].mxu0
    %2620 = vmatprep.mubr.f32.mxu0 %v2229
    %2621 = vmatmul.mubr.f32.gmra.mrb[0].mxu0 %v2228
    %v2622 = vpop.f32.mrb[0].mxu0
    %v2623 = vadd.f32 %v2399, %v2622
    %v2624 = vpop.f32.mrb[0].mxu0
    %2625 = vmatprep.mubr.f32.mxu0 %v2231
    %2626 = vmatmul.mubr.f32.gmra.mrb[0].mxu0 %v2230
    %v2627 = vpop.f32.mrb[0].mxu0
    %v2628 = vadd.f32 %v2404, %v2627
    %v2629 = vpop.f32.mrb[0].mxu0
    %2630 = vmatprep.mubr.f32.mxu0 %v2233
    %2631 = vmatmul.mubr.f32.gmra.mrb[0].mxu0 %v2232
    %v2632 = vpop.f32.mrb[0].mxu0
    %v2633 = vadd.f32 %v2409, %v2632
    %v2634 = vpop.f32.mrb[0].mxu0
    %2635 = vmatprep.mubr.f32.mxu0 %v2235
    %2636 = vmatmul.mubr.f32.gmra.mrb[0].mxu0 %v2234
    %v2637 = vpop.f32.mrb[0].mxu0
    %v2638 = vadd.f32 %v2414, %v2637
    %v2639 = vpop.f32.mrb[0].mxu0
    %2640 = vmatprep.mubr.f32.mxu0 %v2237
    %2641 = vmatmul.mubr.f32.gmra.mrb[0].mxu0 %v2236
    %v2642 = vpop.f32.mrb[0].mxu0
    %v2643 = vadd.f32 %v2419, %v2642
    %v2644 = vpop.f32.mrb[0].mxu0
    %2645 = vmatprep.mubr.f32.mxu0 %v2239
    %2646 = vmatmul.mubr.f32.gmra.mrb[0].mxu0 %v2238
    %v2647 = vpop.f32.mrb[0].mxu0
    %v2648 = vadd.f32 %v2424, %v2647
    %v2649 = vpop.f32.mrb[0].mxu0
    %2650 = vmatprep.mubr.f32.mxu0 %v2241
    %2651 = vmatmul.mubr.f32.gmra.mrb[0].mxu0 %v2240
    %v2652 = vpop.f32.mrb[0].mxu0
    %v2653 = vadd.f32 %v2429, %v2652
    %v2654 = vpop.f32.mrb[0].mxu0
    %2655 = vmatprep.mubr.f32.mxu0 %v2243
    %2656 = vmatmul.mubr.f32.gmra.mrb[0].mxu0 %v2242
    %v2657 = vpop.f32.mrb[0].mxu0
    %v2658 = vadd.f32 %v2434, %v2657
    %v2659 = vpop.f32.mrb[0].mxu0
    %2660 = vdwg.mxu0
    %v2661 = vtanh.pop %v2503
    %v2662 = vtanh.pop %v2508
    %v2663 = vtanh.pop %v2513
    %v2664 = vtanh.pop %v2518
    %v2665 = vtanh.pop %v2523
    %v2666 = vtanh.pop %v2528
    %v2667 = vtanh.pop %v2533
    %v2668 = vtanh.pop %v2538
    %v2669 = vtanh.pop %v2543
    %v2670 = vtanh.pop %v2548
    %v2671 = vtanh.pop %v2553
    %v2672 = vtanh.pop %v2558
    %v2673 = vtanh.pop %v2563
    %v2674 = vtanh.pop %v2568
    %v2675 = vtanh.pop %v2573
    %v2676 = vtanh.pop %v2578
    %v2677 = vtanh.pop %v2583
    %v2678 = vtanh.pop %v2588
    %v2679 = vtanh.pop %v2593
    %v2680 = vtanh.pop %v2598
    %v2681 = vtanh.pop %v2603
    %v2682 = vtanh.pop %v2608
    %v2683 = vtanh.pop %v2613
    %v2684 = vtanh.pop %v2618
    %v2685 = vtanh.pop %v2623
    %v2686 = vtanh.pop %v2628
    %v2687 = vtanh.pop %v2633
    %v2688 = vtanh.pop %v2638
    %v2689 = vtanh.pop %v2643
    %v2690 = vtanh.pop %v2648
    %v2691 = vtanh.pop %v2653
    %v2692 = vtanh.pop %v2658
    %v2693 = vld [vmem:[%s11] sm:$0xff]
    %v2694 = vld [vmem:[%s11 + $0x8] sm:$0xff]
    %v2695 = vld [vmem:[%s11 + $0x10] sm:$0xff]
    %v2696 = vld [vmem:[%s11 + $0x18] sm:$0xff]
    %2698 = vset.pattern.permute.xlu0 0
    %2699 = vperm.xlu0 %2698, %v2693
    %v2700 = vpop.permute.xlu0 %2699
    %2703 = vset.pattern.permute.xlu0 0
    %2704 = vperm.xlu0 %2703, %v2694
    %v2705 = vpop.permute.xlu0 %2704
    %2708 = vset.pattern.permute.xlu0 0
    %2709 = vperm.xlu0 %2708, %v2695
    %v2710 = vpop.permute.xlu0 %2709
    %2713 = vset.pattern.permute.xlu0 0
    %2714 = vperm.xlu0 %2713, %v2696
    %v2715 = vpop.permute.xlu0 %2714
    %v2717 = vmul.f32 %v2661, %v2700
    %v2718 = vmul.f32 %v2662, %v2705
    %v2719 = vmul.f32 %v2663, %v2710
    %v2720 = vmul.f32 %v2664, %v2715
    %v2721 = vadd.f32 %v2717, %v2718
    %v2722 = vadd.f32 %v2721, %v2719
    %v2723 = vadd.f32 %v2722, %v2720
    %v2724 = vrot.slane %v2723, 4
    %v2725 = vadd.f32 %v2723, %v2724
    %v2726 = vrot.slane %v2725, 2
    %v2727 = vadd.f32 %v2725, %v2726
    %v2728 = vrot.slane %v2727, 1
    %v2729 = vadd.f32 %v2727, %v2728
    %v2730 = vmul.f32 %v2665, %v2700
    %v2731 = vmul.f32 %v2666, %v2705
    %v2732 = vmul.f32 %v2667, %v2710
    %v2733 = vmul.f32 %v2668, %v2715
    %v2734 = vadd.f32 %v2730, %v2731
    %v2735 = vadd.f32 %v2734, %v2732
    %v2736 = vadd.f32 %v2735, %v2733
    %v2737 = vrot.slane %v2736, 4
    %v2738 = vadd.f32 %v2736, %v2737
    %v2739 = vrot.slane %v2738, 2
    %v2740 = vadd.f32 %v2738, %v2739
    %v2741 = vrot.slane %v2740, 1
    %v2742 = vadd.f32 %v2740, %v2741
    %v2743 = vmul.f32 %v2669, %v2700
    %v2744 = vmul.f32 %v2670, %v2705
    %v2745 = vmul.f32 %v2671, %v2710
    %v2746 = vmul.f32 %v2672, %v2715
    %v2747 = vadd.f32 %v2743, %v2744
    %v2748 = vadd.f32 %v2747, %v2745
    %v2749 = vadd.f32 %v2748, %v2746
    %v2750 = vrot.slane %v2749, 4
    %v2751 = vadd.f32 %v2749, %v2750
    %v2752 = vrot.slane %v2751, 2
    %v2753 = vadd.f32 %v2751, %v2752
    %v2754 = vrot.slane %v2753, 1
    %v2755 = vadd.f32 %v2753, %v2754
    %v2756 = vmul.f32 %v2673, %v2700
    %v2757 = vmul.f32 %v2674, %v2705
    %v2758 = vmul.f32 %v2675, %v2710
    %v2759 = vmul.f32 %v2676, %v2715
    %v2760 = vadd.f32 %v2756, %v2757
    %v2761 = vadd.f32 %v2760, %v2758
    %v2762 = vadd.f32 %v2761, %v2759
    %v2763 = vrot.slane %v2762, 4
    %v2764 = vadd.f32 %v2762, %v2763
    %v2765 = vrot.slane %v2764, 2
    %v2766 = vadd.f32 %v2764, %v2765
    %v2767 = vrot.slane %v2766, 1
    %v2768 = vadd.f32 %v2766, %v2767
    %v2769 = vmul.f32 %v2677, %v2700
    %v2770 = vmul.f32 %v2678, %v2705
    %v2771 = vmul.f32 %v2679, %v2710
    %v2772 = vmul.f32 %v2680, %v2715
    %v2773 = vadd.f32 %v2769, %v2770
    %v2774 = vadd.f32 %v2773, %v2771
    %v2775 = vadd.f32 %v2774, %v2772
    %v2776 = vrot.slane %v2775, 4
    %v2777 = vadd.f32 %v2775, %v2776
    %v2778 = vrot.slane %v2777, 2
    %v2779 = vadd.f32 %v2777, %v2778
    %v2780 = vrot.slane %v2779, 1
    %v2781 = vadd.f32 %v2779, %v2780
    %v2782 = vmul.f32 %v2681, %v2700
    %v2783 = vmul.f32 %v2682, %v2705
    %v2784 = vmul.f32 %v2683, %v2710
    %v2785 = vmul.f32 %v2684, %v2715
    %v2786 = vadd.f32 %v2782, %v2783
    %v2787 = vadd.f32 %v2786, %v2784
    %v2788 = vadd.f32 %v2787, %v2785
    %v2789 = vrot.slane %v2788, 4
    %v2790 = vadd.f32 %v2788, %v2789
    %v2791 = vrot.slane %v2790, 2
    %v2792 = vadd.f32 %v2790, %v2791
    %v2793 = vrot.slane %v2792, 1
    %v2794 = vadd.f32 %v2792, %v2793
    %v2795 = vmul.f32 %v2685, %v2700
    %v2796 = vmul.f32 %v2686, %v2705
    %v2797 = vmul.f32 %v2687, %v2710
    %v2798 = vmul.f32 %v2688, %v2715
    %v2799 = vadd.f32 %v2795, %v2796
    %v2800 = vadd.f32 %v2799, %v2797
    %v2801 = vadd.f32 %v2800, %v2798
    %v2802 = vrot.slane %v2801, 4
    %v2803 = vadd.f32 %v2801, %v2802
    %v2804 = vrot.slane %v2803, 2
    %v2805 = vadd.f32 %v2803, %v2804
    %v2806 = vrot.slane %v2805, 1
    %v2807 = vadd.f32 %v2805, %v2806
    %v2808 = vmul.f32 %v2689, %v2700
    %v2809 = vmul.f32 %v2690, %v2705
    %v2810 = vmul.f32 %v2691, %v2710
    %v2811 = vmul.f32 %v2692, %v2715
    %v2812 = vadd.f32 %v2808, %v2809
    %v2813 = vadd.f32 %v2812, %v2810
    %v2814 = vadd.f32 %v2813, %v2811
    %v2815 = vrot.slane %v2814, 4
    %v2816 = vadd.f32 %v2814, %v2815
    %v2817 = vrot.slane %v2816, 2
    %v2818 = vadd.f32 %v2816, %v2817
    %v2819 = vrot.slane %v2818, 1
    %v2820 = vadd.f32 %v2818, %v2819
    %vm2821 = vcmask 1040384
    %v2822 = vsel %vm2821, %v2729, %v2742
    %vm2823 = vcmask 1041408
    %v2824 = vsel %vm2823, %v2822, %v2755
    %vm2825 = vcmask 1042432
    %v2826 = vsel %vm2825, %v2824, %v2768
    %vm2827 = vcmask 1043456
    %v2828 = vsel %vm2827, %v2826, %v2781
    %vm2829 = vcmask 1044480
    %v2830 = vsel %vm2829, %v2828, %v2794
    %vm2831 = vcmask 1045504
    %v2832 = vsel %vm2831, %v2830, %v2807
    %vm2833 = vcmask 1046528
    %v2834 = vsel %vm2833, %v2832, %v2820
    %v2835 = vld [vmem:[%s12] sm:$0xff]
    %2837 = vset.pattern.permute.xlu0 0
    %2838 = vperm.xlu0 %2837, %v2835
    %v2839 = vpop.permute.xlu0 %2838
    %v2841 = vadd.f32 %v2834, %v2839
    %2842 = vst [vmem:[#allocation5] sm:$0xff] %v2841
    // Predicated region
    $region58: #{tpu_custom_call.1} parent=1 // pred_check
      _
    $region59: #{tpu_custom_call.1} parent=1 // pred_check_branch
      %2844 = sbr.rel (0) target = $region61
    $region60: #{tpu_custom_call.1} parent=1 // pred_region
      %s2846 = ssub.s32 128, 128
      %2847 = vsyncadd [#allocation4], %s2846
      %s2849 = sshll.u32 [#allocation5], 4
      %s2850 = int_to_ptr.vmem [resolvable:$true] %s2849
      %2852 = dma.vmem_to_hbm [thread:$0]  %s2850, 128, %s13, [#allocation4]
    $region61: #{tpu_custom_call.1} parent=1 // pred_fallthru
      _
    // Predicated region
    $region62: #{tpu_custom_call.1} parent=1 // pred_check
      _
    $region63: #{tpu_custom_call.1} parent=1 // pred_check_branch
      %2854 = sbr.rel (0) target = $region65
    $region64: #{tpu_custom_call.1} parent=1 // pred_region
      %2855 = dma.done [#allocation4], 128
    $region65: #{tpu_custom_call.1} parent=1 // pred_fallthru
      _
    %2856 = vsyncpa [#allocation3], 1
    %2857 = vsyncpa [#allocation4], 1

</llo_original>
